<compile_context>
chip_gen: v5e
topology: v5e:2x2
jax: 0.10.0
libtpu: 0.0.40
codegen_flags: <defaults>
</compile_context>

<pallas_src>
import functools

import jax
import jax.numpy as jnp
from jax import lax
from jax.experimental import pallas as pl
from jax.experimental.pallas import tpu as pltpu


def _lstm_reg_kernel(x2_ref, wih0_ref, whh0_ref, b0_ref,
                     w1_ref, b1_ref,
                     wreg_ref, breg_ref,
                     out_ref,
                     *, seq_len, batch, hidden):
    """Fused 2-layer LSTM + Linear, everything resident in VMEM.

    x2_ref   : (S*B, I)       flattened input sequence (f32)
    wih0_ref : (I, 4H)  bf16  layer-0 input weights (transposed, g-cols x2)
    whh0_ref : (H, 4H)  bf16  layer-0 recurrent weights (transposed, g-cols x2)
    b0_ref   : (1, 4H)  f32   layer-0 fused bias (b_ih + b_hh, g-slice x2)
    w1_ref   : (2H, 4H) bf16  layer-1 fused weights [W_ih1 ; W_hh1] (g-cols x2)
    b1_ref   : (1, 4H)  f32   layer-1 fused bias (g-slice x2)
    wreg_ref : (1, H) if O==1 else (H, O)   final Linear weight (f32)
    breg_ref : (1, O)   f32   final Linear bias
    out_ref  : (S*B, O)       output
    """
    S, B, H = seq_len, batch, hidden

    # Load weights once; they stay resident for the whole kernel.  Recurrent
    # matrices arrive as bf16 (MXU fast path); biases / regression stay f32.
    wih0 = wih0_ref[...]
    whh0 = whh0_ref[...]
    w1 = w1_ref[...]
    b0 = b0_ref[...]
    # Hoisted bias broadcast: one broadcast_in_dim instead of S of them.
    b1b = jnp.broadcast_to(b1_ref[...], (B, 4 * H))
    wreg = wreg_ref[...]
    breg = breg_ref[...]

    # Hoisted, batched layer-0 input projection: one (S*B, I) @ (I, 4H) MXU
    # call instead of S tiny K=I matmuls on the serial critical path.  The
    # fused layer-0 bias is folded in here.
    xp = jnp.dot(x2_ref[...].astype(jnp.bfloat16), wih0,
                 preferred_element_type=jnp.float32) + b0

    def gates_to_hc(gates, c_prev):
        # One full-lane sigmoid over all 4H gate columns (PyTorch order
        # [i | f | g | o]).  The g-gate columns were pre-scaled by 2 in the
        # wrapper, so tanh(x) == 2*sigmoid(2x) - 1 recovers the g gate.
        s = jax.nn.sigmoid(gates)
        i = s[:, 0 * H:1 * H]
        f = s[:, 1 * H:2 * H]
        g = 2.0 * s[:, 2 * H:3 * H] - 1.0
        o = s[:, 3 * H:4 * H]
        c = f * c_prev + i * g
        h = o * jnp.tanh(c)
        return h, c

    zeros = jnp.zeros((B, H), jnp.float32)
    h0, c0 = zeros, zeros
    h1, c1 = zeros, zeros
    h1_seq = []

    # Static unroll over the (small, fixed) sequence length: zero loop
    # overhead and full scheduler visibility across steps / layers (layer 1
    # of step t only depends on the previous step's h1 through w1, so it can
    # overlap with layer 0 of the next step).
    for t in range(S):
        # ---- layer 0: only the recurrent matmul is left in the loop ----
        gates0 = xp[t * B:(t + 1) * B, :] + jnp.dot(
            h0.astype(jnp.bfloat16), whh0, preferred_element_type=jnp.float32)
        h0, c0 = gates_to_hc(gates0, c0)

        # ---- layer 1: single fused (B, 2H) @ (2H, 4H) matmul ----
        h01 = jnp.concatenate([h0, h1], axis=1).astype(jnp.bfloat16)
        gates1 = jnp.dot(h01, w1, preferred_element_type=jnp.float32) + b1b
        h1, c1 = gates_to_hc(gates1, c1)
        h1_seq.append(h1)   # carried as a value; no VMEM scratch store

    # Assemble the (S*B, H) hidden sequence as a value (fits in ~2 vregs).
    h1_all = jnp.concatenate(h1_seq, axis=0)

    O = out_ref.shape[1]
    if O == 1:
        # VPU multiply + XLU lane reduce instead of an N=1 MXU matmul: no
        # MXU drain in the tail, no lane-padded (H,1) weight tile.
        y = jnp.sum(h1_all * wreg, axis=-1, keepdims=True) + breg
    else:
        y = jnp.dot(h1_all, wreg, preferred_element_type=jnp.float32) + breg
    out_ref[...] = y.astype(out_ref.dtype)


def lstm_reg_forward(x, params):
    """Pallas forward of lstm_reg. x: (S, B, I) float32 -> (S, B, O)."""
    S, B, I = x.shape
    H = params["w_hh_l0"].shape[1]        # (4H, H)
    O = params["w_reg"].shape[0]          # (O, H)

    # Glue (weight preprocessing only, done once): transpose for row-major
    # `x @ W` matmuls, fuse the two LSTM biases per layer, pre-scale the
    # g-gate columns by 2 (tanh(x) == 2*sigmoid(2x) - 1, exact in bf16 since
    # 2 is a power of two), and cast the matmul weights to bf16 so the MXU
    # takes its fast path in the serial recurrence.
    def prep(w):                                   # (4H, K) -> (K, 4H) bf16
        wt = jnp.transpose(w)
        wt = wt.at[:, 2 * H:3 * H].multiply(2.0)
        return wt.astype(jnp.bfloat16)

    def prep_bias(b_ih, b_hh):                     # -> (1, 4H) f32, g-slice*2
        b = (b_ih + b_hh).reshape(1, 4 * H)
        return b.at[:, 2 * H:3 * H].multiply(2.0)

    wih0_t = prep(params["w_ih_l0"])                                # (I, 4H)
    whh0_t = prep(params["w_hh_l0"])                                # (H, 4H)
    b0 = prep_bias(params["b_ih_l0"], params["b_hh_l0"])            # (1, 4H)
    # Layer-1 fused weight: [W_ih1 ; W_hh1] along K, so one K=2H matmul per
    # step instead of two K=H matmuls.
    w1_cat = jnp.concatenate(
        [prep(params["w_ih_l1"]), prep(params["w_hh_l1"])], axis=0)  # (2H,4H)
    b1 = prep_bias(params["b_ih_l1"], params["b_hh_l1"])            # (1, 4H)
    if O == 1:
        wreg = params["w_reg"].reshape(1, H)        # (1, H) row — VPU path
    else:
        wreg = jnp.transpose(params["w_reg"])       # (H, O)
    breg = params["b_reg"].reshape(1, O)            # (1, O)

    x2 = x.reshape(S * B, I)   # layout plumbing only (row-major flatten)

    vmem = pl.BlockSpec(memory_space=pltpu.MemorySpace.VMEM)
    kernel = functools.partial(_lstm_reg_kernel,
                               seq_len=S, batch=B, hidden=H)
    y = pl.pallas_call(
        kernel,
        out_shape=jax.ShapeDtypeStruct((S * B, O), jnp.float32),
        in_specs=[vmem] * 8,
        out_specs=vmem,
    )(x2, wih0_t, whh0_t, b0, w1_cat, b1, wreg, breg)
    return y.reshape(S, B, O)


def lstm_reg_reference(x, params):
    """Pure-JAX f32 reference matching PyTorch nn.LSTM(num_layers=2) + Linear."""
    S, B, I = x.shape
    H = params["w_hh_l0"].shape[1]

    def run_layer(seq, w_ih, w_hh, b_ih, b_hh):
        def cell(carry, x_t):
            h, c = carry
            gates = x_t @ w_ih.T + b_ih + h @ w_hh.T + b_hh
            i = jax.nn.sigmoid(gates[:, 0 * H:1 * H])
            f = jax.nn.sigmoid(gates[:, 1 * H:2 * H])
            g = jnp.tanh(gates[:, 2 * H:3 * H])
            o = jax.nn.sigmoid(gates[:, 3 * H:4 * H])
            c = f * c + i * g
            h = o * jnp.tanh(c)
            return (h, c), h
        init = (jnp.zeros((B, H), jnp.float32), jnp.zeros((B, H), jnp.float32))
        _, hs = lax.scan(cell, init, seq)
        return hs

    h0 = run_layer(x, params["w_ih_l0"], params["w_hh_l0"],
                   params["b_ih_l0"], params["b_hh_l0"])
    h1 = run_layer(h0, params["w_ih_l1"], params["w_hh_l1"],
                   params["b_ih_l1"], params["b_hh_l1"])
    y = h1.reshape(S * B, H) @ params["w_reg"].T + params["b_reg"]
    return y.reshape(S, B, -1)


def init_params(key, input_size, hidden_size, output_size):
    """Deterministic init mirroring PyTorch's U(-1/sqrt(H), 1/sqrt(H))."""
    H = hidden_size
    bound = 1.0 / (H ** 0.5)
    names_shapes = [
        ("w_ih_l0", (4 * H, input_size)),
        ("w_hh_l0", (4 * H, H)),
        ("b_ih_l0", (4 * H,)),
        ("b_hh_l0", (4 * H,)),
        ("w_ih_l1", (4 * H, H)),
        ("w_hh_l1", (4 * H, H)),
        ("b_ih_l1", (4 * H,)),
        ("b_hh_l1", (4 * H,)),
        ("w_reg", (output_size, H)),
        ("b_reg", (output_size,)),
    ]
    params = {}
    keys = jax.random.split(key, len(names_shapes))
    for k, (name, shape) in zip(keys, names_shapes):
        params[name] = jax.random.uniform(
            k, shape, jnp.float32, minval=-bound, maxval=bound)
    return params


if __name__ == "__main__":
    SEQ, BATCH = 8, 2
    INPUT_SIZE, HIDDEN_SIZE, OUTPUT_SIZE = 4, 32, 1

    key = jax.random.PRNGKey(0)
    kx, kp = jax.random.split(key)
    x = jax.random.normal(kx, (SEQ, BATCH, INPUT_SIZE), jnp.float32)
    params = init_params(kp, INPUT_SIZE, HIDDEN_SIZE, OUTPUT_SIZE)

    out = lstm_reg_forward(x, params)
    out = jax.block_until_ready(out)

    ref = jax.block_until_ready(lstm_reg_reference(x, params))
    assert out.shape == (SEQ, BATCH, OUTPUT_SIZE), out.shape
    # Tolerance accounts for (a) the single-sigmoid g-gate trick (exact math,
    # not bit-identical) and (b) bf16 matmul operands in the recurrence
    # (h/c carry and all elementwise math stay f32; only dot inputs are
    # rounded to bf16, giving ~1e-3-class absolute deviation at these
    # magnitudes vs. the f32 reference).
    assert jnp.allclose(out, ref, atol=5e-3, rtol=2e-2), \
        float(jnp.max(jnp.abs(out - ref)))

    print("KERNEL_OK")
</pallas_src>

<mosaic_0001>
module attributes {stable_mosaic.version = 11 : i64} {
  func.func @_lstm_reg_kernel(%arg0: memref<16x4xf32, #tpu.memory_space<vmem>>, %arg1: memref<4x128xbf16, #tpu.memory_space<vmem>>, %arg2: memref<32x128xbf16, #tpu.memory_space<vmem>>, %arg3: memref<1x128xf32, #tpu.memory_space<vmem>>, %arg4: memref<64x128xbf16, #tpu.memory_space<vmem>>, %arg5: memref<1x128xf32, #tpu.memory_space<vmem>>, %arg6: memref<1x32xf32, #tpu.memory_space<vmem>>, %arg7: memref<1x1xf32, #tpu.memory_space<vmem>>, %arg8: memref<16x1xf32, #tpu.memory_space<vmem>>) attributes {dimension_semantics = [], scalar_prefetch = 0 : i64, scratch_operands = 0 : i64, tpu.core_type = #tpu.core_type<tc>} {
    %c0 = arith.constant 0 : index
    %c0_0 = arith.constant 0 : index
    %0 = vector.load %arg1[%c0, %c0_0] : memref<4x128xbf16, #tpu.memory_space<vmem>>, vector<4x128xbf16>
    %c0_1 = arith.constant 0 : index
    %c0_2 = arith.constant 0 : index
    %1 = vector.load %arg2[%c0_1, %c0_2] : memref<32x128xbf16, #tpu.memory_space<vmem>>, vector<32x128xbf16>
    %c0_3 = arith.constant 0 : index
    %c0_4 = arith.constant 0 : index
    %2 = vector.load %arg4[%c0_3, %c0_4] : memref<64x128xbf16, #tpu.memory_space<vmem>>, vector<64x128xbf16>
    %c0_5 = arith.constant 0 : index
    %c0_6 = arith.constant 0 : index
    %3 = vector.load %arg3[%c0_5, %c0_6] : memref<1x128xf32, #tpu.memory_space<vmem>>, vector<1x128xf32>
    %c0_7 = arith.constant 0 : index
    %c0_8 = arith.constant 0 : index
    %4 = vector.load %arg5[%c0_7, %c0_8] : memref<1x128xf32, #tpu.memory_space<vmem>>, vector<1x128xf32>
    %5 = vector.shape_cast %4 : vector<1x128xf32> to vector<1x128xf32>
    %6 = vector.broadcast %5 : vector<1x128xf32> to vector<2x128xf32>
    %c0_9 = arith.constant 0 : index
    %c0_10 = arith.constant 0 : index
    %7 = vector.load %arg6[%c0_9, %c0_10] : memref<1x32xf32, #tpu.memory_space<vmem>>, vector<1x32xf32>
    %c0_11 = arith.constant 0 : index
    %c0_12 = arith.constant 0 : index
    %8 = vector.load %arg7[%c0_11, %c0_12] : memref<1x1xf32, #tpu.memory_space<vmem>>, vector<1x1xf32>
    %c0_13 = arith.constant 0 : index
    %c0_14 = arith.constant 0 : index
    %9 = vector.load %arg0[%c0_13, %c0_14] : memref<16x4xf32, #tpu.memory_space<vmem>>, vector<16x4xf32>
    %10 = arith.truncf %9 : vector<16x4xf32> to vector<16x4xbf16>
    %cst = arith.constant dense<0.000000e+00> : vector<16x128xf32>
    %11 = tpu.matmul %10, %0, %cst {dimension_numbers = #tpu.dot_dimension_numbers<[1], [0], [0], [1], [0, 0, 1, 1], [], []>} : vector<16x4xbf16>, vector<4x128xbf16>, vector<16x128xf32> -> vector<16x128xf32>
    %12 = vector.broadcast %3 : vector<1x128xf32> to vector<16x128xf32>
    %13 = arith.addf %11, %12 : vector<16x128xf32>
    %cst_15 = arith.constant 0.000000e+00 : f32
    %14 = vector.broadcast %cst_15 : f32 to vector<2x32xf32>
    %15 = vector.extract_strided_slice %13 {offsets = [0, 0], sizes = [2, 128], strides = [1, 1]} : vector<16x128xf32> to vector<2x128xf32>
    %16 = arith.truncf %14 : vector<2x32xf32> to vector<2x32xbf16>
    %cst_16 = arith.constant dense<0.000000e+00> : vector<2x128xf32>
    %17 = tpu.matmul %16, %1, %cst_16 {dimension_numbers = #tpu.dot_dimension_numbers<[1], [0], [0], [1], [0, 0, 1, 1], [], []>} : vector<2x32xbf16>, vector<32x128xbf16>, vector<2x128xf32> -> vector<2x128xf32>
    %18 = arith.addf %15, %17 : vector<2x128xf32>
    %19 = arith.negf %18 : vector<2x128xf32>
    %20 = math.exp %19 : vector<2x128xf32>
    %cst_17 = arith.constant 1.000000e+00 : f32
    %21 = vector.broadcast %cst_17 : f32 to vector<2x128xf32>
    %22 = arith.addf %21, %20 : vector<2x128xf32>
    %23 = arith.divf %21, %22 : vector<2x128xf32>
    %24 = vector.extract_strided_slice %23 {offsets = [0, 0], sizes = [2, 32], strides = [1, 1]} : vector<2x128xf32> to vector<2x32xf32>
    %25 = vector.extract_strided_slice %23 {offsets = [0, 32], sizes = [2, 32], strides = [1, 1]} : vector<2x128xf32> to vector<2x32xf32>
    %26 = vector.extract_strided_slice %23 {offsets = [0, 64], sizes = [2, 32], strides = [1, 1]} : vector<2x128xf32> to vector<2x32xf32>
    %cst_18 = arith.constant 2.000000e+00 : f32
    %27 = vector.broadcast %cst_18 : f32 to vector<2x32xf32>
    %28 = arith.mulf %27, %26 : vector<2x32xf32>
    %cst_19 = arith.constant 1.000000e+00 : f32
    %29 = vector.broadcast %cst_19 : f32 to vector<2x32xf32>
    %30 = arith.subf %28, %29 : vector<2x32xf32>
    %31 = vector.extract_strided_slice %23 {offsets = [0, 96], sizes = [2, 32], strides = [1, 1]} : vector<2x128xf32> to vector<2x32xf32>
    %32 = arith.mulf %25, %14 : vector<2x32xf32>
    %33 = arith.mulf %24, %30 : vector<2x32xf32>
    %34 = arith.addf %32, %33 : vector<2x32xf32>
    %35 = math.tanh %34 : vector<2x32xf32>
    %36 = arith.mulf %31, %35 : vector<2x32xf32>
    %37 = tpu.concatenate %36, %14 in 1 : vector<2x32xf32>, vector<2x32xf32> -> vector<2x64xf32>
    %38 = arith.truncf %37 : vector<2x64xf32> to vector<2x64xbf16>
    %cst_20 = arith.constant dense<0.000000e+00> : vector<2x128xf32>
    %39 = tpu.matmul %38, %2, %cst_20 {dimension_numbers = #tpu.dot_dimension_numbers<[1], [0], [0], [1], [0, 0, 1, 1], [], []>} : vector<2x64xbf16>, vector<64x128xbf16>, vector<2x128xf32> -> vector<2x128xf32>
    %40 = arith.addf %39, %6 : vector<2x128xf32>
    %41 = arith.negf %40 : vector<2x128xf32>
    %42 = math.exp %41 : vector<2x128xf32>
    %cst_21 = arith.constant 1.000000e+00 : f32
    %43 = vector.broadcast %cst_21 : f32 to vector<2x128xf32>
    %44 = arith.addf %43, %42 : vector<2x128xf32>
    %45 = arith.divf %43, %44 : vector<2x128xf32>
    %46 = vector.extract_strided_slice %45 {offsets = [0, 0], sizes = [2, 32], strides = [1, 1]} : vector<2x128xf32> to vector<2x32xf32>
    %47 = vector.extract_strided_slice %45 {offsets = [0, 32], sizes = [2, 32], strides = [1, 1]} : vector<2x128xf32> to vector<2x32xf32>
    %48 = vector.extract_strided_slice %45 {offsets = [0, 64], sizes = [2, 32], strides = [1, 1]} : vector<2x128xf32> to vector<2x32xf32>
    %cst_22 = arith.constant 2.000000e+00 : f32
    %49 = vector.broadcast %cst_22 : f32 to vector<2x32xf32>
    %50 = arith.mulf %49, %48 : vector<2x32xf32>
    %cst_23 = arith.constant 1.000000e+00 : f32
    %51 = vector.broadcast %cst_23 : f32 to vector<2x32xf32>
    %52 = arith.subf %50, %51 : vector<2x32xf32>
    %53 = vector.extract_strided_slice %45 {offsets = [0, 96], sizes = [2, 32], strides = [1, 1]} : vector<2x128xf32> to vector<2x32xf32>
    %54 = arith.mulf %47, %14 : vector<2x32xf32>
    %55 = arith.mulf %46, %52 : vector<2x32xf32>
    %56 = arith.addf %54, %55 : vector<2x32xf32>
    %57 = math.tanh %56 : vector<2x32xf32>
    %58 = arith.mulf %53, %57 : vector<2x32xf32>
    %59 = vector.extract_strided_slice %13 {offsets = [2, 0], sizes = [2, 128], strides = [1, 1]} : vector<16x128xf32> to vector<2x128xf32>
    %60 = arith.truncf %36 : vector<2x32xf32> to vector<2x32xbf16>
    %cst_24 = arith.constant dense<0.000000e+00> : vector<2x128xf32>
    %61 = tpu.matmul %60, %1, %cst_24 {dimension_numbers = #tpu.dot_dimension_numbers<[1], [0], [0], [1], [0, 0, 1, 1], [], []>} : vector<2x32xbf16>, vector<32x128xbf16>, vector<2x128xf32> -> vector<2x128xf32>
    %62 = arith.addf %59, %61 : vector<2x128xf32>
    %63 = arith.negf %62 : vector<2x128xf32>
    %64 = math.exp %63 : vector<2x128xf32>
    %cst_25 = arith.constant 1.000000e+00 : f32
    %65 = vector.broadcast %cst_25 : f32 to vector<2x128xf32>
    %66 = arith.addf %65, %64 : vector<2x128xf32>
    %67 = arith.divf %65, %66 : vector<2x128xf32>
    %68 = vector.extract_strided_slice %67 {offsets = [0, 0], sizes = [2, 32], strides = [1, 1]} : vector<2x128xf32> to vector<2x32xf32>
    %69 = vector.extract_strided_slice %67 {offsets = [0, 32], sizes = [2, 32], strides = [1, 1]} : vector<2x128xf32> to vector<2x32xf32>
    %70 = vector.extract_strided_slice %67 {offsets = [0, 64], sizes = [2, 32], strides = [1, 1]} : vector<2x128xf32> to vector<2x32xf32>
    %cst_26 = arith.constant 2.000000e+00 : f32
    %71 = vector.broadcast %cst_26 : f32 to vector<2x32xf32>
    %72 = arith.mulf %71, %70 : vector<2x32xf32>
    %cst_27 = arith.constant 1.000000e+00 : f32
    %73 = vector.broadcast %cst_27 : f32 to vector<2x32xf32>
    %74 = arith.subf %72, %73 : vector<2x32xf32>
    %75 = vector.extract_strided_slice %67 {offsets = [0, 96], sizes = [2, 32], strides = [1, 1]} : vector<2x128xf32> to vector<2x32xf32>
    %76 = arith.mulf %69, %34 : vector<2x32xf32>
    %77 = arith.mulf %68, %74 : vector<2x32xf32>
    %78 = arith.addf %76, %77 : vector<2x32xf32>
    %79 = math.tanh %78 : vector<2x32xf32>
    %80 = arith.mulf %75, %79 : vector<2x32xf32>
    %81 = tpu.concatenate %80, %58 in 1 : vector<2x32xf32>, vector<2x32xf32> -> vector<2x64xf32>
    %82 = arith.truncf %81 : vector<2x64xf32> to vector<2x64xbf16>
    %cst_28 = arith.constant dense<0.000000e+00> : vector<2x128xf32>
    %83 = tpu.matmul %82, %2, %cst_28 {dimension_numbers = #tpu.dot_dimension_numbers<[1], [0], [0], [1], [0, 0, 1, 1], [], []>} : vector<2x64xbf16>, vector<64x128xbf16>, vector<2x128xf32> -> vector<2x128xf32>
    %84 = arith.addf %83, %6 : vector<2x128xf32>
    %85 = arith.negf %84 : vector<2x128xf32>
    %86 = math.exp %85 : vector<2x128xf32>
    %cst_29 = arith.constant 1.000000e+00 : f32
    %87 = vector.broadcast %cst_29 : f32 to vector<2x128xf32>
    %88 = arith.addf %87, %86 : vector<2x128xf32>
    %89 = arith.divf %87, %88 : vector<2x128xf32>
    %90 = vector.extract_strided_slice %89 {offsets = [0, 0], sizes = [2, 32], strides = [1, 1]} : vector<2x128xf32> to vector<2x32xf32>
    %91 = vector.extract_strided_slice %89 {offsets = [0, 32], sizes = [2, 32], strides = [1, 1]} : vector<2x128xf32> to vector<2x32xf32>
    %92 = vector.extract_strided_slice %89 {offsets = [0, 64], sizes = [2, 32], strides = [1, 1]} : vector<2x128xf32> to vector<2x32xf32>
    %cst_30 = arith.constant 2.000000e+00 : f32
    %93 = vector.broadcast %cst_30 : f32 to vector<2x32xf32>
    %94 = arith.mulf %93, %92 : vector<2x32xf32>
    %cst_31 = arith.constant 1.000000e+00 : f32
    %95 = vector.broadcast %cst_31 : f32 to vector<2x32xf32>
    %96 = arith.subf %94, %95 : vector<2x32xf32>
    %97 = vector.extract_strided_slice %89 {offsets = [0, 96], sizes = [2, 32], strides = [1, 1]} : vector<2x128xf32> to vector<2x32xf32>
    %98 = arith.mulf %91, %56 : vector<2x32xf32>
    %99 = arith.mulf %90, %96 : vector<2x32xf32>
    %100 = arith.addf %98, %99 : vector<2x32xf32>
    %101 = math.tanh %100 : vector<2x32xf32>
    %102 = arith.mulf %97, %101 : vector<2x32xf32>
    %103 = vector.extract_strided_slice %13 {offsets = [4, 0], sizes = [2, 128], strides = [1, 1]} : vector<16x128xf32> to vector<2x128xf32>
    %104 = arith.truncf %80 : vector<2x32xf32> to vector<2x32xbf16>
    %cst_32 = arith.constant dense<0.000000e+00> : vector<2x128xf32>
    %105 = tpu.matmul %104, %1, %cst_32 {dimension_numbers = #tpu.dot_dimension_numbers<[1], [0], [0], [1], [0, 0, 1, 1], [], []>} : vector<2x32xbf16>, vector<32x128xbf16>, vector<2x128xf32> -> vector<2x128xf32>
    %106 = arith.addf %103, %105 : vector<2x128xf32>
    %107 = arith.negf %106 : vector<2x128xf32>
    %108 = math.exp %107 : vector<2x128xf32>
    %cst_33 = arith.constant 1.000000e+00 : f32
    %109 = vector.broadcast %cst_33 : f32 to vector<2x128xf32>
    %110 = arith.addf %109, %108 : vector<2x128xf32>
    %111 = arith.divf %109, %110 : vector<2x128xf32>
    %112 = vector.extract_strided_slice %111 {offsets = [0, 0], sizes = [2, 32], strides = [1, 1]} : vector<2x128xf32> to vector<2x32xf32>
    %113 = vector.extract_strided_slice %111 {offsets = [0, 32], sizes = [2, 32], strides = [1, 1]} : vector<2x128xf32> to vector<2x32xf32>
    %114 = vector.extract_strided_slice %111 {offsets = [0, 64], sizes = [2, 32], strides = [1, 1]} : vector<2x128xf32> to vector<2x32xf32>
    %cst_34 = arith.constant 2.000000e+00 : f32
    %115 = vector.broadcast %cst_34 : f32 to vector<2x32xf32>
    %116 = arith.mulf %115, %114 : vector<2x32xf32>
    %cst_35 = arith.constant 1.000000e+00 : f32
    %117 = vector.broadcast %cst_35 : f32 to vector<2x32xf32>
    %118 = arith.subf %116, %117 : vector<2x32xf32>
    %119 = vector.extract_strided_slice %111 {offsets = [0, 96], sizes = [2, 32], strides = [1, 1]} : vector<2x128xf32> to vector<2x32xf32>
    %120 = arith.mulf %113, %78 : vector<2x32xf32>
    %121 = arith.mulf %112, %118 : vector<2x32xf32>
    %122 = arith.addf %120, %121 : vector<2x32xf32>
    %123 = math.tanh %122 : vector<2x32xf32>
    %124 = arith.mulf %119, %123 : vector<2x32xf32>
    %125 = tpu.concatenate %124, %102 in 1 : vector<2x32xf32>, vector<2x32xf32> -> vector<2x64xf32>
    %126 = arith.truncf %125 : vector<2x64xf32> to vector<2x64xbf16>
    %cst_36 = arith.constant dense<0.000000e+00> : vector<2x128xf32>
    %127 = tpu.matmul %126, %2, %cst_36 {dimension_numbers = #tpu.dot_dimension_numbers<[1], [0], [0], [1], [0, 0, 1, 1], [], []>} : vector<2x64xbf16>, vector<64x128xbf16>, vector<2x128xf32> -> vector<2x128xf32>
    %128 = arith.addf %127, %6 : vector<2x128xf32>
    %129 = arith.negf %128 : vector<2x128xf32>
    %130 = math.exp %129 : vector<2x128xf32>
    %cst_37 = arith.constant 1.000000e+00 : f32
    %131 = vector.broadcast %cst_37 : f32 to vector<2x128xf32>
    %132 = arith.addf %131, %130 : vector<2x128xf32>
    %133 = arith.divf %131, %132 : vector<2x128xf32>
    %134 = vector.extract_strided_slice %133 {offsets = [0, 0], sizes = [2, 32], strides = [1, 1]} : vector<2x128xf32> to vector<2x32xf32>
    %135 = vector.extract_strided_slice %133 {offsets = [0, 32], sizes = [2, 32], strides = [1, 1]} : vector<2x128xf32> to vector<2x32xf32>
    %136 = vector.extract_strided_slice %133 {offsets = [0, 64], sizes = [2, 32], strides = [1, 1]} : vector<2x128xf32> to vector<2x32xf32>
    %cst_38 = arith.constant 2.000000e+00 : f32
    %137 = vector.broadcast %cst_38 : f32 to vector<2x32xf32>
    %138 = arith.mulf %137, %136 : vector<2x32xf32>
    %cst_39 = arith.constant 1.000000e+00 : f32
    %139 = vector.broadcast %cst_39 : f32 to vector<2x32xf32>
    %140 = arith.subf %138, %139 : vector<2x32xf32>
    %141 = vector.extract_strided_slice %133 {offsets = [0, 96], sizes = [2, 32], strides = [1, 1]} : vector<2x128xf32> to vector<2x32xf32>
    %142 = arith.mulf %135, %100 : vector<2x32xf32>
    %143 = arith.mulf %134, %140 : vector<2x32xf32>
    %144 = arith.addf %142, %143 : vector<2x32xf32>
    %145 = math.tanh %144 : vector<2x32xf32>
    %146 = arith.mulf %141, %145 : vector<2x32xf32>
    %147 = vector.extract_strided_slice %13 {offsets = [6, 0], sizes = [2, 128], strides = [1, 1]} : vector<16x128xf32> to vector<2x128xf32>
    %148 = arith.truncf %124 : vector<2x32xf32> to vector<2x32xbf16>
    %cst_40 = arith.constant dense<0.000000e+00> : vector<2x128xf32>
    %149 = tpu.matmul %148, %1, %cst_40 {dimension_numbers = #tpu.dot_dimension_numbers<[1], [0], [0], [1], [0, 0, 1, 1], [], []>} : vector<2x32xbf16>, vector<32x128xbf16>, vector<2x128xf32> -> vector<2x128xf32>
    %150 = arith.addf %147, %149 : vector<2x128xf32>
    %151 = arith.negf %150 : vector<2x128xf32>
    %152 = math.exp %151 : vector<2x128xf32>
    %cst_41 = arith.constant 1.000000e+00 : f32
    %153 = vector.broadcast %cst_41 : f32 to vector<2x128xf32>
    %154 = arith.addf %153, %152 : vector<2x128xf32>
    %155 = arith.divf %153, %154 : vector<2x128xf32>
    %156 = vector.extract_strided_slice %155 {offsets = [0, 0], sizes = [2, 32], strides = [1, 1]} : vector<2x128xf32> to vector<2x32xf32>
    %157 = vector.extract_strided_slice %155 {offsets = [0, 32], sizes = [2, 32], strides = [1, 1]} : vector<2x128xf32> to vector<2x32xf32>
    %158 = vector.extract_strided_slice %155 {offsets = [0, 64], sizes = [2, 32], strides = [1, 1]} : vector<2x128xf32> to vector<2x32xf32>
    %cst_42 = arith.constant 2.000000e+00 : f32
    %159 = vector.broadcast %cst_42 : f32 to vector<2x32xf32>
    %160 = arith.mulf %159, %158 : vector<2x32xf32>
    %cst_43 = arith.constant 1.000000e+00 : f32
    %161 = vector.broadcast %cst_43 : f32 to vector<2x32xf32>
    %162 = arith.subf %160, %161 : vector<2x32xf32>
    %163 = vector.extract_strided_slice %155 {offsets = [0, 96], sizes = [2, 32], strides = [1, 1]} : vector<2x128xf32> to vector<2x32xf32>
    %164 = arith.mulf %157, %122 : vector<2x32xf32>
    %165 = arith.mulf %156, %162 : vector<2x32xf32>
    %166 = arith.addf %164, %165 : vector<2x32xf32>
    %167 = math.tanh %166 : vector<2x32xf32>
    %168 = arith.mulf %163, %167 : vector<2x32xf32>
    %169 = tpu.concatenate %168, %146 in 1 : vector<2x32xf32>, vector<2x32xf32> -> vector<2x64xf32>
    %170 = arith.truncf %169 : vector<2x64xf32> to vector<2x64xbf16>
    %cst_44 = arith.constant dense<0.000000e+00> : vector<2x128xf32>
    %171 = tpu.matmul %170, %2, %cst_44 {dimension_numbers = #tpu.dot_dimension_numbers<[1], [0], [0], [1], [0, 0, 1, 1], [], []>} : vector<2x64xbf16>, vector<64x128xbf16>, vector<2x128xf32> -> vector<2x128xf32>
    %172 = arith.addf %171, %6 : vector<2x128xf32>
    %173 = arith.negf %172 : vector<2x128xf32>
    %174 = math.exp %173 : vector<2x128xf32>
    %cst_45 = arith.constant 1.000000e+00 : f32
    %175 = vector.broadcast %cst_45 : f32 to vector<2x128xf32>
    %176 = arith.addf %175, %174 : vector<2x128xf32>
    %177 = arith.divf %175, %176 : vector<2x128xf32>
    %178 = vector.extract_strided_slice %177 {offsets = [0, 0], sizes = [2, 32], strides = [1, 1]} : vector<2x128xf32> to vector<2x32xf32>
    %179 = vector.extract_strided_slice %177 {offsets = [0, 32], sizes = [2, 32], strides = [1, 1]} : vector<2x128xf32> to vector<2x32xf32>
    %180 = vector.extract_strided_slice %177 {offsets = [0, 64], sizes = [2, 32], strides = [1, 1]} : vector<2x128xf32> to vector<2x32xf32>
    %cst_46 = arith.constant 2.000000e+00 : f32
    %181 = vector.broadcast %cst_46 : f32 to vector<2x32xf32>
    %182 = arith.mulf %181, %180 : vector<2x32xf32>
    %cst_47 = arith.constant 1.000000e+00 : f32
    %183 = vector.broadcast %cst_47 : f32 to vector<2x32xf32>
    %184 = arith.subf %182, %183 : vector<2x32xf32>
    %185 = vector.extract_strided_slice %177 {offsets = [0, 96], sizes = [2, 32], strides = [1, 1]} : vector<2x128xf32> to vector<2x32xf32>
    %186 = arith.mulf %179, %144 : vector<2x32xf32>
    %187 = arith.mulf %178, %184 : vector<2x32xf32>
    %188 = arith.addf %186, %187 : vector<2x32xf32>
    %189 = math.tanh %188 : vector<2x32xf32>
    %190 = arith.mulf %185, %189 : vector<2x32xf32>
    %191 = vector.extract_strided_slice %13 {offsets = [8, 0], sizes = [2, 128], strides = [1, 1]} : vector<16x128xf32> to vector<2x128xf32>
    %192 = arith.truncf %168 : vector<2x32xf32> to vector<2x32xbf16>
    %cst_48 = arith.constant dense<0.000000e+00> : vector<2x128xf32>
    %193 = tpu.matmul %192, %1, %cst_48 {dimension_numbers = #tpu.dot_dimension_numbers<[1], [0], [0], [1], [0, 0, 1, 1], [], []>} : vector<2x32xbf16>, vector<32x128xbf16>, vector<2x128xf32> -> vector<2x128xf32>
    %194 = arith.addf %191, %193 : vector<2x128xf32>
    %195 = arith.negf %194 : vector<2x128xf32>
    %196 = math.exp %195 : vector<2x128xf32>
    %cst_49 = arith.constant 1.000000e+00 : f32
    %197 = vector.broadcast %cst_49 : f32 to vector<2x128xf32>
    %198 = arith.addf %197, %196 : vector<2x128xf32>
    %199 = arith.divf %197, %198 : vector<2x128xf32>
    %200 = vector.extract_strided_slice %199 {offsets = [0, 0], sizes = [2, 32], strides = [1, 1]} : vector<2x128xf32> to vector<2x32xf32>
    %201 = vector.extract_strided_slice %199 {offsets = [0, 32], sizes = [2, 32], strides = [1, 1]} : vector<2x128xf32> to vector<2x32xf32>
    %202 = vector.extract_strided_slice %199 {offsets = [0, 64], sizes = [2, 32], strides = [1, 1]} : vector<2x128xf32> to vector<2x32xf32>
    %cst_50 = arith.constant 2.000000e+00 : f32
    %203 = vector.broadcast %cst_50 : f32 to vector<2x32xf32>
    %204 = arith.mulf %203, %202 : vector<2x32xf32>
    %cst_51 = arith.constant 1.000000e+00 : f32
    %205 = vector.broadcast %cst_51 : f32 to vector<2x32xf32>
    %206 = arith.subf %204, %205 : vector<2x32xf32>
    %207 = vector.extract_strided_slice %199 {offsets = [0, 96], sizes = [2, 32], strides = [1, 1]} : vector<2x128xf32> to vector<2x32xf32>
    %208 = arith.mulf %201, %166 : vector<2x32xf32>
    %209 = arith.mulf %200, %206 : vector<2x32xf32>
    %210 = arith.addf %208, %209 : vector<2x32xf32>
    %211 = math.tanh %210 : vector<2x32xf32>
    %212 = arith.mulf %207, %211 : vector<2x32xf32>
    %213 = tpu.concatenate %212, %190 in 1 : vector<2x32xf32>, vector<2x32xf32> -> vector<2x64xf32>
    %214 = arith.truncf %213 : vector<2x64xf32> to vector<2x64xbf16>
    %cst_52 = arith.constant dense<0.000000e+00> : vector<2x128xf32>
    %215 = tpu.matmul %214, %2, %cst_52 {dimension_numbers = #tpu.dot_dimension_numbers<[1], [0], [0], [1], [0, 0, 1, 1], [], []>} : vector<2x64xbf16>, vector<64x128xbf16>, vector<2x128xf32> -> vector<2x128xf32>
    %216 = arith.addf %215, %6 : vector<2x128xf32>
    %217 = arith.negf %216 : vector<2x128xf32>
    %218 = math.exp %217 : vector<2x128xf32>
    %cst_53 = arith.constant 1.000000e+00 : f32
    %219 = vector.broadcast %cst_53 : f32 to vector<2x128xf32>
    %220 = arith.addf %219, %218 : vector<2x128xf32>
    %221 = arith.divf %219, %220 : vector<2x128xf32>
    %222 = vector.extract_strided_slice %221 {offsets = [0, 0], sizes = [2, 32], strides = [1, 1]} : vector<2x128xf32> to vector<2x32xf32>
    %223 = vector.extract_strided_slice %221 {offsets = [0, 32], sizes = [2, 32], strides = [1, 1]} : vector<2x128xf32> to vector<2x32xf32>
    %224 = vector.extract_strided_slice %221 {offsets = [0, 64], sizes = [2, 32], strides = [1, 1]} : vector<2x128xf32> to vector<2x32xf32>
    %cst_54 = arith.constant 2.000000e+00 : f32
    %225 = vector.broadcast %cst_54 : f32 to vector<2x32xf32>
    %226 = arith.mulf %225, %224 : vector<2x32xf32>
    %cst_55 = arith.constant 1.000000e+00 : f32
    %227 = vector.broadcast %cst_55 : f32 to vector<2x32xf32>
    %228 = arith.subf %226, %227 : vector<2x32xf32>
    %229 = vector.extract_strided_slice %221 {offsets = [0, 96], sizes = [2, 32], strides = [1, 1]} : vector<2x128xf32> to vector<2x32xf32>
    %230 = arith.mulf %223, %188 : vector<2x32xf32>
    %231 = arith.mulf %222, %228 : vector<2x32xf32>
    %232 = arith.addf %230, %231 : vector<2x32xf32>
    %233 = math.tanh %232 : vector<2x32xf32>
    %234 = arith.mulf %229, %233 : vector<2x32xf32>
    %235 = vector.extract_strided_slice %13 {offsets = [10, 0], sizes = [2, 128], strides = [1, 1]} : vector<16x128xf32> to vector<2x128xf32>
    %236 = arith.truncf %212 : vector<2x32xf32> to vector<2x32xbf16>
    %cst_56 = arith.constant dense<0.000000e+00> : vector<2x128xf32>
    %237 = tpu.matmul %236, %1, %cst_56 {dimension_numbers = #tpu.dot_dimension_numbers<[1], [0], [0], [1], [0, 0, 1, 1], [], []>} : vector<2x32xbf16>, vector<32x128xbf16>, vector<2x128xf32> -> vector<2x128xf32>
    %238 = arith.addf %235, %237 : vector<2x128xf32>
    %239 = arith.negf %238 : vector<2x128xf32>
    %240 = math.exp %239 : vector<2x128xf32>
    %cst_57 = arith.constant 1.000000e+00 : f32
    %241 = vector.broadcast %cst_57 : f32 to vector<2x128xf32>
    %242 = arith.addf %241, %240 : vector<2x128xf32>
    %243 = arith.divf %241, %242 : vector<2x128xf32>
    %244 = vector.extract_strided_slice %243 {offsets = [0, 0], sizes = [2, 32], strides = [1, 1]} : vector<2x128xf32> to vector<2x32xf32>
    %245 = vector.extract_strided_slice %243 {offsets = [0, 32], sizes = [2, 32], strides = [1, 1]} : vector<2x128xf32> to vector<2x32xf32>
    %246 = vector.extract_strided_slice %243 {offsets = [0, 64], sizes = [2, 32], strides = [1, 1]} : vector<2x128xf32> to vector<2x32xf32>
    %cst_58 = arith.constant 2.000000e+00 : f32
    %247 = vector.broadcast %cst_58 : f32 to vector<2x32xf32>
    %248 = arith.mulf %247, %246 : vector<2x32xf32>
    %cst_59 = arith.constant 1.000000e+00 : f32
    %249 = vector.broadcast %cst_59 : f32 to vector<2x32xf32>
    %250 = arith.subf %248, %249 : vector<2x32xf32>
    %251 = vector.extract_strided_slice %243 {offsets = [0, 96], sizes = [2, 32], strides = [1, 1]} : vector<2x128xf32> to vector<2x32xf32>
    %252 = arith.mulf %245, %210 : vector<2x32xf32>
    %253 = arith.mulf %244, %250 : vector<2x32xf32>
    %254 = arith.addf %252, %253 : vector<2x32xf32>
    %255 = math.tanh %254 : vector<2x32xf32>
    %256 = arith.mulf %251, %255 : vector<2x32xf32>
    %257 = tpu.concatenate %256, %234 in 1 : vector<2x32xf32>, vector<2x32xf32> -> vector<2x64xf32>
    %258 = arith.truncf %257 : vector<2x64xf32> to vector<2x64xbf16>
    %cst_60 = arith.constant dense<0.000000e+00> : vector<2x128xf32>
    %259 = tpu.matmul %258, %2, %cst_60 {dimension_numbers = #tpu.dot_dimension_numbers<[1], [0], [0], [1], [0, 0, 1, 1], [], []>} : vector<2x64xbf16>, vector<64x128xbf16>, vector<2x128xf32> -> vector<2x128xf32>
    %260 = arith.addf %259, %6 : vector<2x128xf32>
    %261 = arith.negf %260 : vector<2x128xf32>
    %262 = math.exp %261 : vector<2x128xf32>
    %cst_61 = arith.constant 1.000000e+00 : f32
    %263 = vector.broadcast %cst_61 : f32 to vector<2x128xf32>
    %264 = arith.addf %263, %262 : vector<2x128xf32>
    %265 = arith.divf %263, %264 : vector<2x128xf32>
    %266 = vector.extract_strided_slice %265 {offsets = [0, 0], sizes = [2, 32], strides = [1, 1]} : vector<2x128xf32> to vector<2x32xf32>
    %267 = vector.extract_strided_slice %265 {offsets = [0, 32], sizes = [2, 32], strides = [1, 1]} : vector<2x128xf32> to vector<2x32xf32>
    %268 = vector.extract_strided_slice %265 {offsets = [0, 64], sizes = [2, 32], strides = [1, 1]} : vector<2x128xf32> to vector<2x32xf32>
    %cst_62 = arith.constant 2.000000e+00 : f32
    %269 = vector.broadcast %cst_62 : f32 to vector<2x32xf32>
    %270 = arith.mulf %269, %268 : vector<2x32xf32>
    %cst_63 = arith.constant 1.000000e+00 : f32
    %271 = vector.broadcast %cst_63 : f32 to vector<2x32xf32>
    %272 = arith.subf %270, %271 : vector<2x32xf32>
    %273 = vector.extract_strided_slice %265 {offsets = [0, 96], sizes = [2, 32], strides = [1, 1]} : vector<2x128xf32> to vector<2x32xf32>
    %274 = arith.mulf %267, %232 : vector<2x32xf32>
    %275 = arith.mulf %266, %272 : vector<2x32xf32>
    %276 = arith.addf %274, %275 : vector<2x32xf32>
    %277 = math.tanh %276 : vector<2x32xf32>
    %278 = arith.mulf %273, %277 : vector<2x32xf32>
    %279 = vector.extract_strided_slice %13 {offsets = [12, 0], sizes = [2, 128], strides = [1, 1]} : vector<16x128xf32> to vector<2x128xf32>
    %280 = arith.truncf %256 : vector<2x32xf32> to vector<2x32xbf16>
    %cst_64 = arith.constant dense<0.000000e+00> : vector<2x128xf32>
    %281 = tpu.matmul %280, %1, %cst_64 {dimension_numbers = #tpu.dot_dimension_numbers<[1], [0], [0], [1], [0, 0, 1, 1], [], []>} : vector<2x32xbf16>, vector<32x128xbf16>, vector<2x128xf32> -> vector<2x128xf32>
    %282 = arith.addf %279, %281 : vector<2x128xf32>
    %283 = arith.negf %282 : vector<2x128xf32>
    %284 = math.exp %283 : vector<2x128xf32>
    %cst_65 = arith.constant 1.000000e+00 : f32
    %285 = vector.broadcast %cst_65 : f32 to vector<2x128xf32>
    %286 = arith.addf %285, %284 : vector<2x128xf32>
    %287 = arith.divf %285, %286 : vector<2x128xf32>
    %288 = vector.extract_strided_slice %287 {offsets = [0, 0], sizes = [2, 32], strides = [1, 1]} : vector<2x128xf32> to vector<2x32xf32>
    %289 = vector.extract_strided_slice %287 {offsets = [0, 32], sizes = [2, 32], strides = [1, 1]} : vector<2x128xf32> to vector<2x32xf32>
    %290 = vector.extract_strided_slice %287 {offsets = [0, 64], sizes = [2, 32], strides = [1, 1]} : vector<2x128xf32> to vector<2x32xf32>
    %cst_66 = arith.constant 2.000000e+00 : f32
    %291 = vector.broadcast %cst_66 : f32 to vector<2x32xf32>
    %292 = arith.mulf %291, %290 : vector<2x32xf32>
    %cst_67 = arith.constant 1.000000e+00 : f32
    %293 = vector.broadcast %cst_67 : f32 to vector<2x32xf32>
    %294 = arith.subf %292, %293 : vector<2x32xf32>
    %295 = vector.extract_strided_slice %287 {offsets = [0, 96], sizes = [2, 32], strides = [1, 1]} : vector<2x128xf32> to vector<2x32xf32>
    %296 = arith.mulf %289, %254 : vector<2x32xf32>
    %297 = arith.mulf %288, %294 : vector<2x32xf32>
    %298 = arith.addf %296, %297 : vector<2x32xf32>
    %299 = math.tanh %298 : vector<2x32xf32>
    %300 = arith.mulf %295, %299 : vector<2x32xf32>
    %301 = tpu.concatenate %300, %278 in 1 : vector<2x32xf32>, vector<2x32xf32> -> vector<2x64xf32>
    %302 = arith.truncf %301 : vector<2x64xf32> to vector<2x64xbf16>
    %cst_68 = arith.constant dense<0.000000e+00> : vector<2x128xf32>
    %303 = tpu.matmul %302, %2, %cst_68 {dimension_numbers = #tpu.dot_dimension_numbers<[1], [0], [0], [1], [0, 0, 1, 1], [], []>} : vector<2x64xbf16>, vector<64x128xbf16>, vector<2x128xf32> -> vector<2x128xf32>
    %304 = arith.addf %303, %6 : vector<2x128xf32>
    %305 = arith.negf %304 : vector<2x128xf32>
    %306 = math.exp %305 : vector<2x128xf32>
    %cst_69 = arith.constant 1.000000e+00 : f32
    %307 = vector.broadcast %cst_69 : f32 to vector<2x128xf32>
    %308 = arith.addf %307, %306 : vector<2x128xf32>
    %309 = arith.divf %307, %308 : vector<2x128xf32>
    %310 = vector.extract_strided_slice %309 {offsets = [0, 0], sizes = [2, 32], strides = [1, 1]} : vector<2x128xf32> to vector<2x32xf32>
    %311 = vector.extract_strided_slice %309 {offsets = [0, 32], sizes = [2, 32], strides = [1, 1]} : vector<2x128xf32> to vector<2x32xf32>
    %312 = vector.extract_strided_slice %309 {offsets = [0, 64], sizes = [2, 32], strides = [1, 1]} : vector<2x128xf32> to vector<2x32xf32>
    %cst_70 = arith.constant 2.000000e+00 : f32
    %313 = vector.broadcast %cst_70 : f32 to vector<2x32xf32>
    %314 = arith.mulf %313, %312 : vector<2x32xf32>
    %cst_71 = arith.constant 1.000000e+00 : f32
    %315 = vector.broadcast %cst_71 : f32 to vector<2x32xf32>
    %316 = arith.subf %314, %315 : vector<2x32xf32>
    %317 = vector.extract_strided_slice %309 {offsets = [0, 96], sizes = [2, 32], strides = [1, 1]} : vector<2x128xf32> to vector<2x32xf32>
    %318 = arith.mulf %311, %276 : vector<2x32xf32>
    %319 = arith.mulf %310, %316 : vector<2x32xf32>
    %320 = arith.addf %318, %319 : vector<2x32xf32>
    %321 = math.tanh %320 : vector<2x32xf32>
    %322 = arith.mulf %317, %321 : vector<2x32xf32>
    %323 = vector.extract_strided_slice %13 {offsets = [14, 0], sizes = [2, 128], strides = [1, 1]} : vector<16x128xf32> to vector<2x128xf32>
    %324 = arith.truncf %300 : vector<2x32xf32> to vector<2x32xbf16>
    %cst_72 = arith.constant dense<0.000000e+00> : vector<2x128xf32>
    %325 = tpu.matmul %324, %1, %cst_72 {dimension_numbers = #tpu.dot_dimension_numbers<[1], [0], [0], [1], [0, 0, 1, 1], [], []>} : vector<2x32xbf16>, vector<32x128xbf16>, vector<2x128xf32> -> vector<2x128xf32>
    %326 = arith.addf %323, %325 : vector<2x128xf32>
    %327 = arith.negf %326 : vector<2x128xf32>
    %328 = math.exp %327 : vector<2x128xf32>
    %cst_73 = arith.constant 1.000000e+00 : f32
    %329 = vector.broadcast %cst_73 : f32 to vector<2x128xf32>
    %330 = arith.addf %329, %328 : vector<2x128xf32>
    %331 = arith.divf %329, %330 : vector<2x128xf32>
    %332 = vector.extract_strided_slice %331 {offsets = [0, 0], sizes = [2, 32], strides = [1, 1]} : vector<2x128xf32> to vector<2x32xf32>
    %333 = vector.extract_strided_slice %331 {offsets = [0, 32], sizes = [2, 32], strides = [1, 1]} : vector<2x128xf32> to vector<2x32xf32>
    %334 = vector.extract_strided_slice %331 {offsets = [0, 64], sizes = [2, 32], strides = [1, 1]} : vector<2x128xf32> to vector<2x32xf32>
    %cst_74 = arith.constant 2.000000e+00 : f32
    %335 = vector.broadcast %cst_74 : f32 to vector<2x32xf32>
    %336 = arith.mulf %335, %334 : vector<2x32xf32>
    %cst_75 = arith.constant 1.000000e+00 : f32
    %337 = vector.broadcast %cst_75 : f32 to vector<2x32xf32>
    %338 = arith.subf %336, %337 : vector<2x32xf32>
    %339 = vector.extract_strided_slice %331 {offsets = [0, 96], sizes = [2, 32], strides = [1, 1]} : vector<2x128xf32> to vector<2x32xf32>
    %340 = arith.mulf %333, %298 : vector<2x32xf32>
    %341 = arith.mulf %332, %338 : vector<2x32xf32>
    %342 = arith.addf %340, %341 : vector<2x32xf32>
    %343 = math.tanh %342 : vector<2x32xf32>
    %344 = arith.mulf %339, %343 : vector<2x32xf32>
    %345 = tpu.concatenate %344, %322 in 1 : vector<2x32xf32>, vector<2x32xf32> -> vector<2x64xf32>
    %346 = arith.truncf %345 : vector<2x64xf32> to vector<2x64xbf16>
    %cst_76 = arith.constant dense<0.000000e+00> : vector<2x128xf32>
    %347 = tpu.matmul %346, %2, %cst_76 {dimension_numbers = #tpu.dot_dimension_numbers<[1], [0], [0], [1], [0, 0, 1, 1], [], []>} : vector<2x64xbf16>, vector<64x128xbf16>, vector<2x128xf32> -> vector<2x128xf32>
    %348 = arith.addf %347, %6 : vector<2x128xf32>
    %349 = arith.negf %348 : vector<2x128xf32>
    %350 = math.exp %349 : vector<2x128xf32>
    %cst_77 = arith.constant 1.000000e+00 : f32
    %351 = vector.broadcast %cst_77 : f32 to vector<2x128xf32>
    %352 = arith.addf %351, %350 : vector<2x128xf32>
    %353 = arith.divf %351, %352 : vector<2x128xf32>
    %354 = vector.extract_strided_slice %353 {offsets = [0, 0], sizes = [2, 32], strides = [1, 1]} : vector<2x128xf32> to vector<2x32xf32>
    %355 = vector.extract_strided_slice %353 {offsets = [0, 32], sizes = [2, 32], strides = [1, 1]} : vector<2x128xf32> to vector<2x32xf32>
    %356 = vector.extract_strided_slice %353 {offsets = [0, 64], sizes = [2, 32], strides = [1, 1]} : vector<2x128xf32> to vector<2x32xf32>
    %cst_78 = arith.constant 2.000000e+00 : f32
    %357 = vector.broadcast %cst_78 : f32 to vector<2x32xf32>
    %358 = arith.mulf %357, %356 : vector<2x32xf32>
    %cst_79 = arith.constant 1.000000e+00 : f32
    %359 = vector.broadcast %cst_79 : f32 to vector<2x32xf32>
    %360 = arith.subf %358, %359 : vector<2x32xf32>
    %361 = vector.extract_strided_slice %353 {offsets = [0, 96], sizes = [2, 32], strides = [1, 1]} : vector<2x128xf32> to vector<2x32xf32>
    %362 = arith.mulf %355, %320 : vector<2x32xf32>
    %363 = arith.mulf %354, %360 : vector<2x32xf32>
    %364 = arith.addf %362, %363 : vector<2x32xf32>
    %365 = math.tanh %364 : vector<2x32xf32>
    %366 = arith.mulf %361, %365 : vector<2x32xf32>
    %367 = tpu.concatenate %58, %102, %146, %190, %234, %278, %322, %366 in 0 : vector<2x32xf32>, vector<2x32xf32>, vector<2x32xf32>, vector<2x32xf32>, vector<2x32xf32>, vector<2x32xf32>, vector<2x32xf32>, vector<2x32xf32> -> vector<16x32xf32>
    %368 = vector.broadcast %7 : vector<1x32xf32> to vector<16x32xf32>
    %369 = arith.mulf %367, %368 : vector<16x32xf32>
    %cst_80 = arith.constant dense<0.000000e+00> : vector<16xf32>
    %370 = vector.multi_reduction <add>, %369, %cst_80 [1] : vector<16x32xf32> to vector<16xf32>
    %371 = vector.shape_cast %370 : vector<16xf32> to vector<16x1xf32>
    %372 = vector.broadcast %8 : vector<1x1xf32> to vector<16x1xf32>
    %373 = arith.addf %371, %372 : vector<16x1xf32>
    %c0_81 = arith.constant 0 : index
    %c0_82 = arith.constant 0 : index
    %374 = vector.load %arg8[%c0_81, %c0_82] : memref<16x1xf32, #tpu.memory_space<vmem>>, vector<16x1xf32>
    tpu.vector_store %arg8[%c0_81, %c0_82], %373 {strides = array<i32>} : memref<16x1xf32, #tpu.memory_space<vmem>>, vector<16x1xf32>,
    return
  }
}

</mosaic_0001>

<llo_original>
// kernel: tpu_custom_call.1
$region0: #{tpu_custom_call.1}
  #allocation0 [shape = 'u32[]', space=smem, size = 0x4, offset = 0x4, fixed_abs, tag = 'smem constant byte address 0x4 - core index']
  #allocation1 [shape = 'u32[72,128]{1,0:T(1,128)}', space=vmem, size = 0x9000, scoped, tag = 'internal scratch']
  #allocation2 [shape = 'f32[1,1]{1,0:T(1,128)S(1)}', space=vmem, size = 0x200, scoped, tag = 'scoped memory for tpu_custom_call.1']
  %s0 = inlined_call_operand.vmem [shape: f32[16,4], index: 0, kind: input, shape index: {}]
  %s1 = inlined_call_operand.vmem [shape: bf16[4,128], index: 1, kind: input, shape index: {}]
  %s2 = inlined_call_operand.vmem [shape: bf16[32,128], index: 2, kind: input, shape index: {}]
  %s3 = inlined_call_operand.vmem [shape: f32[1,128], index: 3, kind: input, shape index: {}]
  %s4 = inlined_call_operand.hbm [shape: bf16[64,128], index: 4, kind: input, shape index: {}]
  %s5 = inlined_call_operand.vmem [shape: f32[1,128], index: 5, kind: input, shape index: {}]
  %s6 = inlined_call_operand.vmem [shape: f32[1,32], index: 6, kind: input, shape index: {}]
  %s7 = inlined_call_operand.<no memory space> [shape: f32[1,1], index: 7, kind: input, shape index: {}]
  %s8 = inlined_call_operand.vmem [shape: f32[16,1], index: 8, kind: output, shape index: {}]
  %s9 = sld [smem:[#allocation0]]
  $region46: #{tpu_custom_call.1} parent=0
    _
  %s11 = ssub.s32 1, %s9
  %s12 = scalar_select 0, %s11, %s9
  %v13 = vstv %s7
  %14 = vst [vmem:[#allocation2] sm:$0x1] %v13
  $region1: #{tpu_custom_call.1} parent=0
    #allocation3 [shape = 'u8[16384]{0}', space=vmem, size = 0x4000, scoped, tag = 'input window, operand 4, single buffered']
    #allocation4 [shape = 's32[1]{0}', space=sflag, size = 0x4, scoped, tag = 'scoped memory for tpu_custom_call.1']
    %15 = vsyncpa [#allocation4], 0
    // Predicated region
    $region2: #{tpu_custom_call.1} parent=1 // pred_check
      _
    $region3: #{tpu_custom_call.1} parent=1 // pred_check_branch
      %17 = sbr.rel (0) target = $region5
    $region4: #{tpu_custom_call.1} parent=1 // pred_region
      _
    $region5: #{tpu_custom_call.1} parent=1 // pred_fallthru
      _
    // Predicated region
    $region6: #{tpu_custom_call.1} parent=1 // pred_check
      _
    $region7: #{tpu_custom_call.1} parent=1 // pred_check_branch
      %19 = sbr.rel (0) target = $region9
    $region8: #{tpu_custom_call.1} parent=1 // pred_region
      _
    $region9: #{tpu_custom_call.1} parent=1 // pred_fallthru
      _
    // Predicated region
    $region10: #{tpu_custom_call.1} parent=1 // pred_check
      _
    $region11: #{tpu_custom_call.1} parent=1 // pred_check_branch
      %21 = sbr.rel (0) target = $region13
    $region12: #{tpu_custom_call.1} parent=1 // pred_region
      _
    $region13: #{tpu_custom_call.1} parent=1 // pred_fallthru
      _
    // Predicated region
    $region14: #{tpu_custom_call.1} parent=1 // pred_check
      _
    $region15: #{tpu_custom_call.1} parent=1 // pred_check_branch
      %23 = sbr.rel (0) target = $region17
    $region16: #{tpu_custom_call.1} parent=1 // pred_region
      _
    $region17: #{tpu_custom_call.1} parent=1 // pred_fallthru
      _
    // Predicated region
    $region18: #{tpu_custom_call.1} parent=1 // pred_check
      _
    $region19: #{tpu_custom_call.1} parent=1 // pred_check_branch
      %25 = sbr.rel (0) target = $region21
    $region20: #{tpu_custom_call.1} parent=1 // pred_region
      %27 = vsyncadd [#allocation4], 0
      %s28 = sshll.u32 %s4, 4
      %s29 = int_to_ptr.hbm [resolvable:$true] %s28
      %s30 = sshll.u32 [#allocation3], 4
      %s31 = int_to_ptr.vmem [resolvable:$true] %s30
      %36 = dma.hbm_to_vmem [thread:$0]  %s29, 512, %s31, [#allocation4], 64, 64, 4
    $region21: #{tpu_custom_call.1} parent=1 // pred_fallthru
      _
    // Predicated region
    $region22: #{tpu_custom_call.1} parent=1 // pred_check
      _
    $region23: #{tpu_custom_call.1} parent=1 // pred_check_branch
      %38 = sbr.rel (0) target = $region25
    $region24: #{tpu_custom_call.1} parent=1 // pred_region
      _
    $region25: #{tpu_custom_call.1} parent=1 // pred_fallthru
      _
    // Predicated region
    $region26: #{tpu_custom_call.1} parent=1 // pred_check
      _
    $region27: #{tpu_custom_call.1} parent=1 // pred_check_branch
      %40 = sbr.rel (0) target = $region29
    $region28: #{tpu_custom_call.1} parent=1 // pred_region
      _
    $region29: #{tpu_custom_call.1} parent=1 // pred_fallthru
      _
    // Predicated region
    $region30: #{tpu_custom_call.1} parent=1 // pred_check
      _
    $region31: #{tpu_custom_call.1} parent=1 // pred_check_branch
      %42 = sbr.rel (0) target = $region33
    $region32: #{tpu_custom_call.1} parent=1 // pred_region
      _
    $region33: #{tpu_custom_call.1} parent=1 // pred_fallthru
      _
    // Predicated region
    $region34: #{tpu_custom_call.1} parent=1 // pred_check
      _
    $region35: #{tpu_custom_call.1} parent=1 // pred_check_branch
      %44 = sbr.rel (0) target = $region37
    $region36: #{tpu_custom_call.1} parent=1 // pred_region
      %46 = dma.done [#allocation4], 512
    $region37: #{tpu_custom_call.1} parent=1 // pred_fallthru
      _
    %v48 = vld [vmem:[%s1] sm:$0x3]
    %v49 = vld [vmem:[%s2] sm:$0xf]
    %v50 = vld [vmem:[%s2 + $0x4] sm:$0xf]
    %v51 = vld [vmem:[%s2 + $0x8] sm:$0xf]
    %v52 = vld [vmem:[%s2 + $0xc] sm:$0xf]
    %v53 = vld [vmem:[#allocation3] sm:$0xf]
    %v54 = vld [vmem:[#allocation3 + $0x4] sm:$0xf]
    %v55 = vld [vmem:[#allocation3 + $0x8] sm:$0xf]
    %v56 = vld [vmem:[#allocation3 + $0xc] sm:$0xf]
    %v57 = vld [vmem:[#allocation3 + $0x10] sm:$0xf]
    %v58 = vld [vmem:[#allocation3 + $0x14] sm:$0xf]
    %v59 = vld [vmem:[#allocation3 + $0x18] sm:$0xf]
    %v60 = vld [vmem:[#allocation3 + $0x1c] sm:$0xf]
    %v61 = vld [vmem:[%s3] sm:$0x1]
    %v62 = vld [vmem:[%s5] sm:$0x1]
    %v64 = vperm.slane %v62, 0
    %v66 = vld [vmem:[%s6] sm:$0x1]
    %v67 = vld [vmem:[#allocation2] sm:$0x1]
    %v68 = vld [vmem:[%s0] sm:$0xff]
    %v69 = vld [vmem:[%s0 + $0x8] sm:$0xff]
    %v70 = vpack.c.bf16 %v69, %v68
    %v72 = vperm.slane %v61, 0
    %vm74 = vcmask 31744
    %v76 = vsel %vm74, %v70, 0
    %vm78 = vcmask 1041408
    %v80 = vsel %vm78, %v48, 0
    %82 = vmatpush.bf16.msra.mxu0 0
    %83 = vmatpush.bf16.msra.mxu0 0
    %84 = vmatpush.bf16.msra.mxu0 0
    %85 = vmatpush.bf16.msra.mxu0 0
    %86 = vmatpush.bf16.msra.mxu0 0
    %87 = vmatpush.bf16.msra.mxu0 0
    %88 = vmatpush.bf16.msra.mxu0 0
    %89 = vmatpush.bf16.msra.mxu0 %v80
    %90 = vmatmul.bf16.gmra.mxu0 %v76
    %v91 = vpop.f32.mrf.mxu0
    %v92 = vadd.f32 %v72, %v91
    %v93 = vpop.f32.mrf.mxu0
    %v94 = vadd.f32 %v72, %v93
    %95 = vdwg.mxu0
    %v100 = vunpack.c.l.b16 %v49
    %v101 = vunpack.c.l.b16 %v50
    %v102 = vunpack.c.l.b16 %v51
    %v103 = vunpack.c.l.b16 %v52
    %v104 = vpack.c.b16 %v101, %v100
    %v105 = vpack.c.b16 %v103, %v102
    %vm108 = vcmask 261120
    %v110 = vsel %vm108, 0, 0
    %112 = vmatpush.bf16.msra.mxu0 0
    %113 = vmatpush.bf16.msra.mxu0 0
    %114 = vmatpush.bf16.msra.mxu0 0
    %115 = vmatpush.bf16.msra.mxu0 0
    %116 = vmatpush.bf16.msra.mxu0 0
    %117 = vmatpush.bf16.msra.mxu0 0
    %118 = vmatpush.bf16.msra.mxu0 %v105
    %119 = vmatpush.bf16.msra.mxu0 %v104
    %120 = vmatmul.bf16.gmra.mxu0 %v110
    %v121 = vpop.f32.mrf.mxu0
    %v122 = vadd.f32 0.0, %v121
    %v123 = vpop.f32.mrf.mxu0
    %124 = vdwg.mxu0
    %v125 = vadd.f32 %v92, %v122
    %v126 = vxor.u32 %v125, 2147483648
    %v127 = vmul.f32 %v126, 1.442695
    %v128 = vpow.pop %v127
    %v129 = vadd.f32 %v128, 1.0
    %v130 = vrcp.pop %v129
    %v131 = vmul.f32 %v129, %v130
    %v132 = vsub.f32 1.0, %v131
    %v133 = vmul.f32 %v130, %v132
    %v134 = vadd.f32 %v130, %v133
    %vm135 = vweird.f32 %v129
    %vm136 = vweird.f32 %v130
    %vm137 = vmor %vm135, %vm136
    %v138 = vsel %vm137, %v130, %v134
    %v139 = vand.u32 2147483647, %v129
    %vm140 = vcmp.eq.f32.partialorder %v139, 8.507059e+37
    %v141 = vand.u32 %v129, 2147483648
    %v142 = vor.u32 1.1754944e-38, %v141
    %v143 = vsel %vm140, %v142, %v138
    %v144 = vmul.f32 1.0, %v143
    %v145 = vmul.f32 %v144, 2.0
    %v146 = vsub.f32 %v145, 1.0
    %v147 = vmul.f32 %v144, 0.0
    %149 = vrot.lane.b32.xlu0 %v146, 64
    %v150 = vpop.permute.xlu0 %149
    %v152 = vmul.f32 %v144, %v150
    %154 = vrot.lane.b32.xlu0 %v152, 32
    %v155 = vpop.permute.xlu0 %154
    %v157 = vadd.f32 %v147, %v155
    %v158 = vtanh.pop %v157
    %160 = vrot.lane.b32.xlu0 %v158, 64
    %v161 = vpop.permute.xlu0 %160
    %v163 = vmul.f32 %v144, %v161
    %165 = vrot.lane.b32.xlu0 %v163, 32
    %v166 = vpop.permute.xlu0 %165
    %v168 = vsel %vm108, %v166, 0.0
    %v169 = vpack.c.bf16 %v168, %v168
    %v178 = vunpack.c.l.b16 %v53
    %v179 = vunpack.c.l.b16 %v54
    %v180 = vunpack.c.l.b16 %v55
    %v181 = vunpack.c.l.b16 %v56
    %v182 = vunpack.c.l.b16 %v57
    %v183 = vunpack.c.l.b16 %v58
    %v184 = vunpack.c.l.b16 %v59
    %v185 = vunpack.c.l.b16 %v60
    %v186 = vpack.c.b16 %v179, %v178
    %v187 = vpack.c.b16 %v181, %v180
    %v188 = vpack.c.b16 %v183, %v182
    %v189 = vpack.c.b16 %v185, %v184
    %vm194 = vcmask 523264
    %v196 = vsel %vm194, %v169, 0
    %198 = vmatpush.bf16.msra.mxu0 0
    %199 = vmatpush.bf16.msra.mxu0 0
    %200 = vmatpush.bf16.msra.mxu0 0
    %201 = vmatpush.bf16.msra.mxu0 0
    %202 = vmatpush.bf16.msra.mxu0 %v189
    %203 = vmatpush.bf16.msra.mxu0 %v188
    %204 = vmatpush.bf16.msra.mxu0 %v187
    %205 = vmatpush.bf16.msra.mxu0 %v186
    %206 = vmatmul.bf16.gmra.mxu0 %v196
    %v207 = vpop.f32.mrf.mxu0
    %v208 = vadd.f32 %v64, %v207
    %v209 = vpop.f32.mrf.mxu0
    %210 = vdwg.mxu0
    %v211 = vxor.u32 %v208, 2147483648
    %v212 = vmul.f32 %v211, 1.442695
    %v213 = vpow.pop %v212
    %v214 = vadd.f32 %v213, 1.0
    %v215 = vrcp.pop %v214
    %v216 = vmul.f32 %v214, %v215
    %v217 = vsub.f32 1.0, %v216
    %v218 = vmul.f32 %v215, %v217
    %v219 = vadd.f32 %v215, %v218
    %vm220 = vweird.f32 %v214
    %vm221 = vweird.f32 %v215
    %vm222 = vmor %vm220, %vm221
    %v223 = vsel %vm222, %v215, %v219
    %v224 = vand.u32 2147483647, %v214
    %vm225 = vcmp.eq.f32.partialorder %v224, 8.507059e+37
    %v226 = vand.u32 %v214, 2147483648
    %v227 = vor.u32 1.1754944e-38, %v226
    %v228 = vsel %vm225, %v227, %v223
    %v229 = vmul.f32 1.0, %v228
    %v230 = vmul.f32 %v229, 2.0
    %v231 = vsub.f32 %v230, 1.0
    %v232 = vmul.f32 %v229, 0.0
    %234 = vrot.lane.b32.xlu0 %v231, 64
    %v235 = vpop.permute.xlu0 %234
    %v237 = vmul.f32 %v229, %v235
    %239 = vrot.lane.b32.xlu0 %v237, 32
    %v240 = vpop.permute.xlu0 %239
    %v242 = vadd.f32 %v232, %v240
    %v243 = vtanh.pop %v242
    %245 = vrot.lane.b32.xlu0 %v243, 64
    %v246 = vpop.permute.xlu0 %245
    %v248 = vmul.f32 %v229, %v246
    %v249 = vpack.c.bf16 %v163, %v163
    %251 = vrot.lane.b32.xlu0 %v249, 32
    %v252 = vpop.permute.xlu0 %251
    %v254 = vsel %vm108, %v252, 0
    %256 = vmatpush.bf16.msra.mxu0 0
    %257 = vmatpush.bf16.msra.mxu0 0
    %258 = vmatpush.bf16.msra.mxu0 0
    %259 = vmatpush.bf16.msra.mxu0 0
    %260 = vmatpush.bf16.msra.mxu0 0
    %261 = vmatpush.bf16.msra.mxu0 0
    %262 = vmatpush.bf16.msra.mxu0 %v105
    %263 = vmatpush.bf16.msra.mxu0 %v104
    %264 = vmatmul.bf16.gmra.mxu0 %v254
    %v265 = vpop.f32.mrf.mxu0
    %v266 = vadd.f32 0.0, %v265
    %v267 = vpop.f32.mrf.mxu0
    %268 = vdwg.mxu0
    %v270 = vrot.slane %v266, 6
    %v272 = vadd.f32 %v92, %v270
    %v273 = vxor.u32 %v272, 2147483648
    %v274 = vmul.f32 %v273, 1.442695
    %v275 = vpow.pop %v274
    %v276 = vadd.f32 %v275, 1.0
    %v277 = vrcp.pop %v276
    %v278 = vmul.f32 %v276, %v277
    %v279 = vsub.f32 1.0, %v278
    %v280 = vmul.f32 %v277, %v279
    %v281 = vadd.f32 %v277, %v280
    %vm282 = vweird.f32 %v276
    %vm283 = vweird.f32 %v277
    %vm284 = vmor %vm282, %vm283
    %v285 = vsel %vm284, %v277, %v281
    %v286 = vand.u32 2147483647, %v276
    %vm287 = vcmp.eq.f32.partialorder %v286, 8.507059e+37
    %v288 = vand.u32 %v276, 2147483648
    %v289 = vor.u32 1.1754944e-38, %v288
    %v290 = vsel %vm287, %v289, %v285
    %v291 = vmul.f32 1.0, %v290
    %v292 = vmul.f32 %v291, 2.0
    %v293 = vsub.f32 %v292, 1.0
    %v295 = vrot.slane %v157, 6
    %v297 = vmul.f32 %v291, %v295
    %299 = vrot.lane.b32.xlu0 %v293, 64
    %v300 = vpop.permute.xlu0 %299
    %v302 = vmul.f32 %v291, %v300
    %304 = vrot.lane.b32.xlu0 %v302, 32
    %v305 = vpop.permute.xlu0 %304
    %v307 = vadd.f32 %v297, %v305
    %v308 = vtanh.pop %v307
    %310 = vrot.lane.b32.xlu0 %v308, 64
    %v311 = vpop.permute.xlu0 %310
    %v313 = vmul.f32 %v291, %v311
    %315 = vrot.lane.b32.xlu0 %v313, 32
    %v316 = vpop.permute.xlu0 %315
    %v319 = vrot.slane %v248, 6
    %320 = vrot.lane.b32.xlu0 %v319, 64
    %v321 = vpop.permute.xlu0 %320
    %v323 = vsel %vm108, %v316, %v321
    %v324 = vpack.c.bf16 %v323, %v323
    %v326 = vrot.slane %v324, 1
    %v328 = vsel %vm194, %v326, 0
    %330 = vmatpush.bf16.msra.mxu0 0
    %331 = vmatpush.bf16.msra.mxu0 0
    %332 = vmatpush.bf16.msra.mxu0 0
    %333 = vmatpush.bf16.msra.mxu0 0
    %334 = vmatpush.bf16.msra.mxu0 %v189
    %335 = vmatpush.bf16.msra.mxu0 %v188
    %336 = vmatpush.bf16.msra.mxu0 %v187
    %337 = vmatpush.bf16.msra.mxu0 %v186
    %338 = vmatmul.bf16.gmra.mxu0 %v328
    %v339 = vpop.f32.mrf.mxu0
    %v340 = vadd.f32 %v64, %v339
    %v341 = vpop.f32.mrf.mxu0
    %342 = vdwg.mxu0
    %v343 = vxor.u32 %v340, 2147483648
    %v344 = vmul.f32 %v343, 1.442695
    %v345 = vpow.pop %v344
    %v346 = vadd.f32 %v345, 1.0
    %v347 = vrcp.pop %v346
    %v348 = vmul.f32 %v346, %v347
    %v349 = vsub.f32 1.0, %v348
    %v350 = vmul.f32 %v347, %v349
    %v351 = vadd.f32 %v347, %v350
    %vm352 = vweird.f32 %v346
    %vm353 = vweird.f32 %v347
    %vm354 = vmor %vm352, %vm353
    %v355 = vsel %vm354, %v347, %v351
    %v356 = vand.u32 2147483647, %v346
    %vm357 = vcmp.eq.f32.partialorder %v356, 8.507059e+37
    %v358 = vand.u32 %v346, 2147483648
    %v359 = vor.u32 1.1754944e-38, %v358
    %v360 = vsel %vm357, %v359, %v355
    %v361 = vmul.f32 1.0, %v360
    %v362 = vmul.f32 %v361, 2.0
    %v363 = vsub.f32 %v362, 1.0
    %v364 = vmul.f32 %v361, %v242
    %366 = vrot.lane.b32.xlu0 %v363, 64
    %v367 = vpop.permute.xlu0 %366
    %v369 = vmul.f32 %v361, %v367
    %371 = vrot.lane.b32.xlu0 %v369, 32
    %v372 = vpop.permute.xlu0 %371
    %v374 = vadd.f32 %v364, %v372
    %v375 = vtanh.pop %v374
    %377 = vrot.lane.b32.xlu0 %v375, 64
    %v378 = vpop.permute.xlu0 %377
    %v380 = vmul.f32 %v361, %v378
    %v381 = vpack.c.bf16 %v313, %v313
    %v383 = vrot.slane %v381, 1
    %384 = vrot.lane.b32.xlu0 %v383, 32
    %v385 = vpop.permute.xlu0 %384
    %v387 = vsel %vm108, %v385, 0
    %389 = vmatpush.bf16.msra.mxu0 0
    %390 = vmatpush.bf16.msra.mxu0 0
    %391 = vmatpush.bf16.msra.mxu0 0
    %392 = vmatpush.bf16.msra.mxu0 0
    %393 = vmatpush.bf16.msra.mxu0 0
    %394 = vmatpush.bf16.msra.mxu0 0
    %395 = vmatpush.bf16.msra.mxu0 %v105
    %396 = vmatpush.bf16.msra.mxu0 %v104
    %397 = vmatmul.bf16.gmra.mxu0 %v387
    %v398 = vpop.f32.mrf.mxu0
    %v399 = vadd.f32 0.0, %v398
    %v400 = vpop.f32.mrf.mxu0
    %401 = vdwg.mxu0
    %v403 = vrot.slane %v399, 4
    %v405 = vadd.f32 %v92, %v403
    %v406 = vxor.u32 %v405, 2147483648
    %v407 = vmul.f32 %v406, 1.442695
    %v408 = vpow.pop %v407
    %v409 = vadd.f32 %v408, 1.0
    %v410 = vrcp.pop %v409
    %v411 = vmul.f32 %v409, %v410
    %v412 = vsub.f32 1.0, %v411
    %v413 = vmul.f32 %v410, %v412
    %v414 = vadd.f32 %v410, %v413
    %vm415 = vweird.f32 %v409
    %vm416 = vweird.f32 %v410
    %vm417 = vmor %vm415, %vm416
    %v418 = vsel %vm417, %v410, %v414
    %v419 = vand.u32 2147483647, %v409
    %vm420 = vcmp.eq.f32.partialorder %v419, 8.507059e+37
    %v421 = vand.u32 %v409, 2147483648
    %v422 = vor.u32 1.1754944e-38, %v421
    %v423 = vsel %vm420, %v422, %v418
    %v424 = vmul.f32 1.0, %v423
    %v425 = vmul.f32 %v424, 2.0
    %v426 = vsub.f32 %v425, 1.0
    %v428 = vrot.slane %v307, 6
    %v430 = vmul.f32 %v424, %v428
    %432 = vrot.lane.b32.xlu0 %v426, 64
    %v433 = vpop.permute.xlu0 %432
    %v435 = vmul.f32 %v424, %v433
    %437 = vrot.lane.b32.xlu0 %v435, 32
    %v438 = vpop.permute.xlu0 %437
    %v440 = vadd.f32 %v430, %v438
    %v441 = vtanh.pop %v440
    %443 = vrot.lane.b32.xlu0 %v441, 64
    %v444 = vpop.permute.xlu0 %443
    %v446 = vmul.f32 %v424, %v444
    %448 = vrot.lane.b32.xlu0 %v446, 32
    %v449 = vpop.permute.xlu0 %448
    %v452 = vrot.slane %v380, 4
    %453 = vrot.lane.b32.xlu0 %v452, 64
    %v454 = vpop.permute.xlu0 %453
    %v456 = vsel %vm108, %v449, %v454
    %v457 = vpack.c.bf16 %v456, %v456
    %v459 = vrot.slane %v457, 2
    %v461 = vsel %vm194, %v459, 0
    %463 = vmatpush.bf16.msra.mxu0 0
    %464 = vmatpush.bf16.msra.mxu0 0
    %465 = vmatpush.bf16.msra.mxu0 0
    %466 = vmatpush.bf16.msra.mxu0 0
    %467 = vmatpush.bf16.msra.mxu0 %v189
    %468 = vmatpush.bf16.msra.mxu0 %v188
    %469 = vmatpush.bf16.msra.mxu0 %v187
    %470 = vmatpush.bf16.msra.mxu0 %v186
    %471 = vmatmul.bf16.gmra.mxu0 %v461
    %v472 = vpop.f32.mrf.mxu0
    %v473 = vadd.f32 %v64, %v472
    %v474 = vpop.f32.mrf.mxu0
    %475 = vdwg.mxu0
    %v476 = vxor.u32 %v473, 2147483648
    %v477 = vmul.f32 %v476, 1.442695
    %v478 = vpow.pop %v477
    %v479 = vadd.f32 %v478, 1.0
    %v480 = vrcp.pop %v479
    %v481 = vmul.f32 %v479, %v480
    %v482 = vsub.f32 1.0, %v481
    %v483 = vmul.f32 %v480, %v482
    %v484 = vadd.f32 %v480, %v483
    %vm485 = vweird.f32 %v479
    %vm486 = vweird.f32 %v480
    %vm487 = vmor %vm485, %vm486
    %v488 = vsel %vm487, %v480, %v484
    %v489 = vand.u32 2147483647, %v479
    %vm490 = vcmp.eq.f32.partialorder %v489, 8.507059e+37
    %v491 = vand.u32 %v479, 2147483648
    %v492 = vor.u32 1.1754944e-38, %v491
    %v493 = vsel %vm490, %v492, %v488
    %v494 = vmul.f32 1.0, %v493
    %v495 = vmul.f32 %v494, 2.0
    %v496 = vsub.f32 %v495, 1.0
    %v497 = vmul.f32 %v494, %v374
    %499 = vrot.lane.b32.xlu0 %v496, 64
    %v500 = vpop.permute.xlu0 %499
    %v502 = vmul.f32 %v494, %v500
    %504 = vrot.lane.b32.xlu0 %v502, 32
    %v505 = vpop.permute.xlu0 %504
    %v507 = vadd.f32 %v497, %v505
    %v508 = vtanh.pop %v507
    %510 = vrot.lane.b32.xlu0 %v508, 64
    %v511 = vpop.permute.xlu0 %510
    %v513 = vmul.f32 %v494, %v511
    %v514 = vpack.c.bf16 %v446, %v446
    %v516 = vrot.slane %v514, 2
    %517 = vrot.lane.b32.xlu0 %v516, 32
    %v518 = vpop.permute.xlu0 %517
    %v520 = vsel %vm108, %v518, 0
    %522 = vmatpush.bf16.msra.mxu0 0
    %523 = vmatpush.bf16.msra.mxu0 0
    %524 = vmatpush.bf16.msra.mxu0 0
    %525 = vmatpush.bf16.msra.mxu0 0
    %526 = vmatpush.bf16.msra.mxu0 0
    %527 = vmatpush.bf16.msra.mxu0 0
    %528 = vmatpush.bf16.msra.mxu0 %v105
    %529 = vmatpush.bf16.msra.mxu0 %v104
    %530 = vmatmul.bf16.gmra.mxu0 %v520
    %v531 = vpop.f32.mrf.mxu0
    %v532 = vadd.f32 0.0, %v531
    %v533 = vpop.f32.mrf.mxu0
    %534 = vdwg.mxu0
    %v536 = vrot.slane %v532, 2
    %v538 = vadd.f32 %v92, %v536
    %v539 = vxor.u32 %v538, 2147483648
    %v540 = vmul.f32 %v539, 1.442695
    %v541 = vpow.pop %v540
    %v542 = vadd.f32 %v541, 1.0
    %v543 = vrcp.pop %v542
    %v544 = vmul.f32 %v542, %v543
    %v545 = vsub.f32 1.0, %v544
    %v546 = vmul.f32 %v543, %v545
    %v547 = vadd.f32 %v543, %v546
    %vm548 = vweird.f32 %v542
    %vm549 = vweird.f32 %v543
    %vm550 = vmor %vm548, %vm549
    %v551 = vsel %vm550, %v543, %v547
    %v552 = vand.u32 2147483647, %v542
    %vm553 = vcmp.eq.f32.partialorder %v552, 8.507059e+37
    %v554 = vand.u32 %v542, 2147483648
    %v555 = vor.u32 1.1754944e-38, %v554
    %v556 = vsel %vm553, %v555, %v551
    %v557 = vmul.f32 1.0, %v556
    %v558 = vmul.f32 %v557, 2.0
    %v559 = vsub.f32 %v558, 1.0
    %v561 = vrot.slane %v440, 6
    %v563 = vmul.f32 %v557, %v561
    %565 = vrot.lane.b32.xlu0 %v559, 64
    %v566 = vpop.permute.xlu0 %565
    %v568 = vmul.f32 %v557, %v566
    %570 = vrot.lane.b32.xlu0 %v568, 32
    %v571 = vpop.permute.xlu0 %570
    %v573 = vadd.f32 %v563, %v571
    %v574 = vtanh.pop %v573
    %576 = vrot.lane.b32.xlu0 %v574, 64
    %v577 = vpop.permute.xlu0 %576
    %v579 = vmul.f32 %v557, %v577
    %581 = vrot.lane.b32.xlu0 %v579, 32
    %v582 = vpop.permute.xlu0 %581
    %v585 = vrot.slane %v513, 2
    %586 = vrot.lane.b32.xlu0 %v585, 64
    %v587 = vpop.permute.xlu0 %586
    %v589 = vsel %vm108, %v582, %v587
    %v590 = vpack.c.bf16 %v589, %v589
    %v592 = vrot.slane %v590, 3
    %v594 = vsel %vm194, %v592, 0
    %596 = vmatpush.bf16.msra.mxu0 0
    %597 = vmatpush.bf16.msra.mxu0 0
    %598 = vmatpush.bf16.msra.mxu0 0
    %599 = vmatpush.bf16.msra.mxu0 0
    %600 = vmatpush.bf16.msra.mxu0 %v189
    %601 = vmatpush.bf16.msra.mxu0 %v188
    %602 = vmatpush.bf16.msra.mxu0 %v187
    %603 = vmatpush.bf16.msra.mxu0 %v186
    %604 = vmatmul.bf16.gmra.mxu0 %v594
    %v605 = vpop.f32.mrf.mxu0
    %v606 = vadd.f32 %v64, %v605
    %v607 = vpop.f32.mrf.mxu0
    %608 = vdwg.mxu0
    %v609 = vxor.u32 %v606, 2147483648
    %v610 = vmul.f32 %v609, 1.442695
    %v611 = vpow.pop %v610
    %v612 = vadd.f32 %v611, 1.0
    %v613 = vrcp.pop %v612
    %v614 = vmul.f32 %v612, %v613
    %v615 = vsub.f32 1.0, %v614
    %v616 = vmul.f32 %v613, %v615
    %v617 = vadd.f32 %v613, %v616
    %vm618 = vweird.f32 %v612
    %vm619 = vweird.f32 %v613
    %vm620 = vmor %vm618, %vm619
    %v621 = vsel %vm620, %v613, %v617
    %v622 = vand.u32 2147483647, %v612
    %vm623 = vcmp.eq.f32.partialorder %v622, 8.507059e+37
    %v624 = vand.u32 %v612, 2147483648
    %v625 = vor.u32 1.1754944e-38, %v624
    %v626 = vsel %vm623, %v625, %v621
    %v627 = vmul.f32 1.0, %v626
    %v628 = vmul.f32 %v627, 2.0
    %v629 = vsub.f32 %v628, 1.0
    %v630 = vmul.f32 %v627, %v507
    %632 = vrot.lane.b32.xlu0 %v629, 64
    %v633 = vpop.permute.xlu0 %632
    %v635 = vmul.f32 %v627, %v633
    %637 = vrot.lane.b32.xlu0 %v635, 32
    %v638 = vpop.permute.xlu0 %637
    %v640 = vadd.f32 %v630, %v638
    %v641 = vtanh.pop %v640
    %643 = vrot.lane.b32.xlu0 %v641, 64
    %v644 = vpop.permute.xlu0 %643
    %v646 = vmul.f32 %v627, %v644
    %v647 = vpack.c.bf16 %v579, %v579
    %v649 = vrot.slane %v647, 3
    %650 = vrot.lane.b32.xlu0 %v649, 32
    %v651 = vpop.permute.xlu0 %650
    %v653 = vsel %vm108, %v651, 0
    %655 = vmatpush.bf16.msra.mxu0 0
    %656 = vmatpush.bf16.msra.mxu0 0
    %657 = vmatpush.bf16.msra.mxu0 0
    %658 = vmatpush.bf16.msra.mxu0 0
    %659 = vmatpush.bf16.msra.mxu0 0
    %660 = vmatpush.bf16.msra.mxu0 0
    %661 = vmatpush.bf16.msra.mxu0 %v105
    %662 = vmatpush.bf16.msra.mxu0 %v104
    %663 = vmatmul.bf16.gmra.mxu0 %v653
    %v664 = vpop.f32.mrf.mxu0
    %v665 = vadd.f32 0.0, %v664
    %v666 = vpop.f32.mrf.mxu0
    %667 = vdwg.mxu0
    %v668 = vadd.f32 %v94, %v665
    %v669 = vxor.u32 %v668, 2147483648
    %v670 = vmul.f32 %v669, 1.442695
    %v671 = vpow.pop %v670
    %v672 = vadd.f32 %v671, 1.0
    %v673 = vrcp.pop %v672
    %v674 = vmul.f32 %v672, %v673
    %v675 = vsub.f32 1.0, %v674
    %v676 = vmul.f32 %v673, %v675
    %v677 = vadd.f32 %v673, %v676
    %vm678 = vweird.f32 %v672
    %vm679 = vweird.f32 %v673
    %vm680 = vmor %vm678, %vm679
    %v681 = vsel %vm680, %v673, %v677
    %v682 = vand.u32 2147483647, %v672
    %vm683 = vcmp.eq.f32.partialorder %v682, 8.507059e+37
    %v684 = vand.u32 %v672, 2147483648
    %v685 = vor.u32 1.1754944e-38, %v684
    %v686 = vsel %vm683, %v685, %v681
    %v687 = vmul.f32 1.0, %v686
    %v688 = vmul.f32 %v687, 2.0
    %v689 = vsub.f32 %v688, 1.0
    %v691 = vrot.slane %v573, 6
    %v693 = vmul.f32 %v687, %v691
    %695 = vrot.lane.b32.xlu0 %v689, 64
    %v696 = vpop.permute.xlu0 %695
    %v698 = vmul.f32 %v687, %v696
    %700 = vrot.lane.b32.xlu0 %v698, 32
    %v701 = vpop.permute.xlu0 %700
    %v703 = vadd.f32 %v693, %v701
    %v704 = vtanh.pop %v703
    %706 = vrot.lane.b32.xlu0 %v704, 64
    %v707 = vpop.permute.xlu0 %706
    %v709 = vmul.f32 %v687, %v707
    %711 = vrot.lane.b32.xlu0 %v709, 32
    %v712 = vpop.permute.xlu0 %711
    %715 = vrot.lane.b32.xlu0 %v646, 64
    %v716 = vpop.permute.xlu0 %715
    %v718 = vsel %vm108, %v712, %v716
    %v719 = vpack.c.bf16 %v718, %v718
    %v721 = vsel %vm194, %v719, 0
    %723 = vmatpush.bf16.msra.mxu0 0
    %724 = vmatpush.bf16.msra.mxu0 0
    %725 = vmatpush.bf16.msra.mxu0 0
    %726 = vmatpush.bf16.msra.mxu0 0
    %727 = vmatpush.bf16.msra.mxu0 %v189
    %728 = vmatpush.bf16.msra.mxu0 %v188
    %729 = vmatpush.bf16.msra.mxu0 %v187
    %730 = vmatpush.bf16.msra.mxu0 %v186
    %731 = vmatmul.bf16.gmra.mxu0 %v721
    %v732 = vpop.f32.mrf.mxu0
    %v733 = vadd.f32 %v64, %v732
    %v734 = vpop.f32.mrf.mxu0
    %735 = vdwg.mxu0
    %v736 = vxor.u32 %v733, 2147483648
    %v737 = vmul.f32 %v736, 1.442695
    %v738 = vpow.pop %v737
    %v739 = vadd.f32 %v738, 1.0
    %v740 = vrcp.pop %v739
    %v741 = vmul.f32 %v739, %v740
    %v742 = vsub.f32 1.0, %v741
    %v743 = vmul.f32 %v740, %v742
    %v744 = vadd.f32 %v740, %v743
    %vm745 = vweird.f32 %v739
    %vm746 = vweird.f32 %v740
    %vm747 = vmor %vm745, %vm746
    %v748 = vsel %vm747, %v740, %v744
    %v749 = vand.u32 2147483647, %v739
    %vm750 = vcmp.eq.f32.partialorder %v749, 8.507059e+37
    %v751 = vand.u32 %v739, 2147483648
    %v752 = vor.u32 1.1754944e-38, %v751
    %v753 = vsel %vm750, %v752, %v748
    %v754 = vmul.f32 1.0, %v753
    %v755 = vmul.f32 %v754, 2.0
    %v756 = vsub.f32 %v755, 1.0
    %v757 = vmul.f32 %v754, %v640
    %759 = vrot.lane.b32.xlu0 %v756, 64
    %v760 = vpop.permute.xlu0 %759
    %v762 = vmul.f32 %v754, %v760
    %764 = vrot.lane.b32.xlu0 %v762, 32
    %v765 = vpop.permute.xlu0 %764
    %v767 = vadd.f32 %v757, %v765
    %v768 = vtanh.pop %v767
    %770 = vrot.lane.b32.xlu0 %v768, 64
    %v771 = vpop.permute.xlu0 %770
    %v773 = vmul.f32 %v754, %v771
    %v774 = vpack.c.bf16 %v709, %v709
    %776 = vrot.lane.b32.xlu0 %v774, 32
    %v777 = vpop.permute.xlu0 %776
    %v779 = vsel %vm108, %v777, 0
    %781 = vmatpush.bf16.msra.mxu0 0
    %782 = vmatpush.bf16.msra.mxu0 0
    %783 = vmatpush.bf16.msra.mxu0 0
    %784 = vmatpush.bf16.msra.mxu0 0
    %785 = vmatpush.bf16.msra.mxu0 0
    %786 = vmatpush.bf16.msra.mxu0 0
    %787 = vmatpush.bf16.msra.mxu0 %v105
    %788 = vmatpush.bf16.msra.mxu0 %v104
    %789 = vmatmul.bf16.gmra.mxu0 %v779
    %v790 = vpop.f32.mrf.mxu0
    %v791 = vadd.f32 0.0, %v790
    %v792 = vpop.f32.mrf.mxu0
    %793 = vdwg.mxu0
    %v795 = vrot.slane %v791, 6
    %v797 = vadd.f32 %v94, %v795
    %v798 = vxor.u32 %v797, 2147483648
    %v799 = vmul.f32 %v798, 1.442695
    %v800 = vpow.pop %v799
    %v801 = vadd.f32 %v800, 1.0
    %v802 = vrcp.pop %v801
    %v803 = vmul.f32 %v801, %v802
    %v804 = vsub.f32 1.0, %v803
    %v805 = vmul.f32 %v802, %v804
    %v806 = vadd.f32 %v802, %v805
    %vm807 = vweird.f32 %v801
    %vm808 = vweird.f32 %v802
    %vm809 = vmor %vm807, %vm808
    %v810 = vsel %vm809, %v802, %v806
    %v811 = vand.u32 2147483647, %v801
    %vm812 = vcmp.eq.f32.partialorder %v811, 8.507059e+37
    %v813 = vand.u32 %v801, 2147483648
    %v814 = vor.u32 1.1754944e-38, %v813
    %v815 = vsel %vm812, %v814, %v810
    %v816 = vmul.f32 1.0, %v815
    %v817 = vmul.f32 %v816, 2.0
    %v818 = vsub.f32 %v817, 1.0
    %v820 = vrot.slane %v703, 6
    %v822 = vmul.f32 %v816, %v820
    %824 = vrot.lane.b32.xlu0 %v818, 64
    %v825 = vpop.permute.xlu0 %824
    %v827 = vmul.f32 %v816, %v825
    %829 = vrot.lane.b32.xlu0 %v827, 32
    %v830 = vpop.permute.xlu0 %829
    %v832 = vadd.f32 %v822, %v830
    %v833 = vtanh.pop %v832
    %835 = vrot.lane.b32.xlu0 %v833, 64
    %v836 = vpop.permute.xlu0 %835
    %v838 = vmul.f32 %v816, %v836
    %840 = vrot.lane.b32.xlu0 %v838, 32
    %v841 = vpop.permute.xlu0 %840
    %v844 = vrot.slane %v773, 6
    %845 = vrot.lane.b32.xlu0 %v844, 64
    %v846 = vpop.permute.xlu0 %845
    %v848 = vsel %vm108, %v841, %v846
    %v849 = vpack.c.bf16 %v848, %v848
    %v851 = vrot.slane %v849, 1
    %v853 = vsel %vm194, %v851, 0
    %855 = vmatpush.bf16.msra.mxu0 0
    %856 = vmatpush.bf16.msra.mxu0 0
    %857 = vmatpush.bf16.msra.mxu0 0
    %858 = vmatpush.bf16.msra.mxu0 0
    %859 = vmatpush.bf16.msra.mxu0 %v189
    %860 = vmatpush.bf16.msra.mxu0 %v188
    %861 = vmatpush.bf16.msra.mxu0 %v187
    %862 = vmatpush.bf16.msra.mxu0 %v186
    %863 = vmatmul.bf16.gmra.mxu0 %v853
    %v864 = vpop.f32.mrf.mxu0
    %v865 = vadd.f32 %v64, %v864
    %v866 = vpop.f32.mrf.mxu0
    %867 = vdwg.mxu0
    %v868 = vxor.u32 %v865, 2147483648
    %v869 = vmul.f32 %v868, 1.442695
    %v870 = vpow.pop %v869
    %v871 = vadd.f32 %v870, 1.0
    %v872 = vrcp.pop %v871
    %v873 = vmul.f32 %v871, %v872
    %v874 = vsub.f32 1.0, %v873
    %v875 = vmul.f32 %v872, %v874
    %v876 = vadd.f32 %v872, %v875
    %vm877 = vweird.f32 %v871
    %vm878 = vweird.f32 %v872
    %vm879 = vmor %vm877, %vm878
    %v880 = vsel %vm879, %v872, %v876
    %v881 = vand.u32 2147483647, %v871
    %vm882 = vcmp.eq.f32.partialorder %v881, 8.507059e+37
    %v883 = vand.u32 %v871, 2147483648
    %v884 = vor.u32 1.1754944e-38, %v883
    %v885 = vsel %vm882, %v884, %v880
    %v886 = vmul.f32 1.0, %v885
    %v887 = vmul.f32 %v886, 2.0
    %v888 = vsub.f32 %v887, 1.0
    %v889 = vmul.f32 %v886, %v767
    %891 = vrot.lane.b32.xlu0 %v888, 64
    %v892 = vpop.permute.xlu0 %891
    %v894 = vmul.f32 %v886, %v892
    %896 = vrot.lane.b32.xlu0 %v894, 32
    %v897 = vpop.permute.xlu0 %896
    %v899 = vadd.f32 %v889, %v897
    %v900 = vtanh.pop %v899
    %902 = vrot.lane.b32.xlu0 %v900, 64
    %v903 = vpop.permute.xlu0 %902
    %v905 = vmul.f32 %v886, %v903
    %v906 = vpack.c.bf16 %v838, %v838
    %v908 = vrot.slane %v906, 1
    %909 = vrot.lane.b32.xlu0 %v908, 32
    %v910 = vpop.permute.xlu0 %909
    %v912 = vsel %vm108, %v910, 0
    %914 = vmatpush.bf16.msra.mxu0 0
    %915 = vmatpush.bf16.msra.mxu0 0
    %916 = vmatpush.bf16.msra.mxu0 0
    %917 = vmatpush.bf16.msra.mxu0 0
    %918 = vmatpush.bf16.msra.mxu0 0
    %919 = vmatpush.bf16.msra.mxu0 0
    %920 = vmatpush.bf16.msra.mxu0 %v105
    %921 = vmatpush.bf16.msra.mxu0 %v104
    %922 = vmatmul.bf16.gmra.mxu0 %v912
    %v923 = vpop.f32.mrf.mxu0
    %v924 = vadd.f32 0.0, %v923
    %v925 = vpop.f32.mrf.mxu0
    %926 = vdwg.mxu0
    %v928 = vrot.slane %v924, 4
    %v930 = vadd.f32 %v94, %v928
    %v931 = vxor.u32 %v930, 2147483648
    %v932 = vmul.f32 %v931, 1.442695
    %v933 = vpow.pop %v932
    %v934 = vadd.f32 %v933, 1.0
    %v935 = vrcp.pop %v934
    %v936 = vmul.f32 %v934, %v935
    %v937 = vsub.f32 1.0, %v936
    %v938 = vmul.f32 %v935, %v937
    %v939 = vadd.f32 %v935, %v938
    %vm940 = vweird.f32 %v934
    %vm941 = vweird.f32 %v935
    %vm942 = vmor %vm940, %vm941
    %v943 = vsel %vm942, %v935, %v939
    %v944 = vand.u32 2147483647, %v934
    %vm945 = vcmp.eq.f32.partialorder %v944, 8.507059e+37
    %v946 = vand.u32 %v934, 2147483648
    %v947 = vor.u32 1.1754944e-38, %v946
    %v948 = vsel %vm945, %v947, %v943
    %v949 = vmul.f32 1.0, %v948
    %v950 = vmul.f32 %v949, 2.0
    %v951 = vsub.f32 %v950, 1.0
    %v953 = vrot.slane %v832, 6
    %v955 = vmul.f32 %v949, %v953
    %957 = vrot.lane.b32.xlu0 %v951, 64
    %v958 = vpop.permute.xlu0 %957
    %v960 = vmul.f32 %v949, %v958
    %962 = vrot.lane.b32.xlu0 %v960, 32
    %v963 = vpop.permute.xlu0 %962
    %v965 = vadd.f32 %v955, %v963
    %v966 = vtanh.pop %v965
    %968 = vrot.lane.b32.xlu0 %v966, 64
    %v969 = vpop.permute.xlu0 %968
    %v971 = vmul.f32 %v949, %v969
    %973 = vrot.lane.b32.xlu0 %v971, 32
    %v974 = vpop.permute.xlu0 %973
    %v977 = vrot.slane %v905, 4
    %978 = vrot.lane.b32.xlu0 %v977, 64
    %v979 = vpop.permute.xlu0 %978
    %v981 = vsel %vm108, %v974, %v979
    %v982 = vpack.c.bf16 %v981, %v981
    %v984 = vrot.slane %v982, 2
    %v986 = vsel %vm194, %v984, 0
    %988 = vmatpush.bf16.msra.mxu0 0
    %989 = vmatpush.bf16.msra.mxu0 0
    %990 = vmatpush.bf16.msra.mxu0 0
    %991 = vmatpush.bf16.msra.mxu0 0
    %992 = vmatpush.bf16.msra.mxu0 %v189
    %993 = vmatpush.bf16.msra.mxu0 %v188
    %994 = vmatpush.bf16.msra.mxu0 %v187
    %995 = vmatpush.bf16.msra.mxu0 %v186
    %996 = vmatmul.bf16.gmra.mxu0 %v986
    %v997 = vpop.f32.mrf.mxu0
    %v998 = vadd.f32 %v64, %v997
    %v999 = vpop.f32.mrf.mxu0
    %1000 = vdwg.mxu0
    %v1001 = vxor.u32 %v998, 2147483648
    %v1002 = vmul.f32 %v1001, 1.442695
    %v1003 = vpow.pop %v1002
    %v1004 = vadd.f32 %v1003, 1.0
    %v1005 = vrcp.pop %v1004
    %v1006 = vmul.f32 %v1004, %v1005
    %v1007 = vsub.f32 1.0, %v1006
    %v1008 = vmul.f32 %v1005, %v1007
    %v1009 = vadd.f32 %v1005, %v1008
    %vm1010 = vweird.f32 %v1004
    %vm1011 = vweird.f32 %v1005
    %vm1012 = vmor %vm1010, %vm1011
    %v1013 = vsel %vm1012, %v1005, %v1009
    %v1014 = vand.u32 2147483647, %v1004
    %vm1015 = vcmp.eq.f32.partialorder %v1014, 8.507059e+37
    %v1016 = vand.u32 %v1004, 2147483648
    %v1017 = vor.u32 1.1754944e-38, %v1016
    %v1018 = vsel %vm1015, %v1017, %v1013
    %v1019 = vmul.f32 1.0, %v1018
    %v1020 = vmul.f32 %v1019, 2.0
    %v1021 = vsub.f32 %v1020, 1.0
    %v1022 = vmul.f32 %v1019, %v899
    %1024 = vrot.lane.b32.xlu0 %v1021, 64
    %v1025 = vpop.permute.xlu0 %1024
    %v1027 = vmul.f32 %v1019, %v1025
    %1029 = vrot.lane.b32.xlu0 %v1027, 32
    %v1030 = vpop.permute.xlu0 %1029
    %v1032 = vadd.f32 %v1022, %v1030
    %v1033 = vtanh.pop %v1032
    %1035 = vrot.lane.b32.xlu0 %v1033, 64
    %v1036 = vpop.permute.xlu0 %1035
    %v1038 = vmul.f32 %v1019, %v1036
    %v1039 = vpack.c.bf16 %v971, %v971
    %v1041 = vrot.slane %v1039, 2
    %1042 = vrot.lane.b32.xlu0 %v1041, 32
    %v1043 = vpop.permute.xlu0 %1042
    %v1045 = vsel %vm108, %v1043, 0
    %1047 = vmatpush.bf16.msra.mxu0 0
    %1048 = vmatpush.bf16.msra.mxu0 0
    %1049 = vmatpush.bf16.msra.mxu0 0
    %1050 = vmatpush.bf16.msra.mxu0 0
    %1051 = vmatpush.bf16.msra.mxu0 0
    %1052 = vmatpush.bf16.msra.mxu0 0
    %1053 = vmatpush.bf16.msra.mxu0 %v105
    %1054 = vmatpush.bf16.msra.mxu0 %v104
    %1055 = vmatmul.bf16.gmra.mxu0 %v1045
    %v1056 = vpop.f32.mrf.mxu0
    %v1057 = vadd.f32 0.0, %v1056
    %v1058 = vpop.f32.mrf.mxu0
    %1059 = vdwg.mxu0
    %v1061 = vrot.slane %v1057, 2
    %v1063 = vadd.f32 %v94, %v1061
    %v1064 = vxor.u32 %v1063, 2147483648
    %v1065 = vmul.f32 %v1064, 1.442695
    %v1066 = vpow.pop %v1065
    %v1067 = vadd.f32 %v1066, 1.0
    %v1068 = vrcp.pop %v1067
    %v1069 = vmul.f32 %v1067, %v1068
    %v1070 = vsub.f32 1.0, %v1069
    %v1071 = vmul.f32 %v1068, %v1070
    %v1072 = vadd.f32 %v1068, %v1071
    %vm1073 = vweird.f32 %v1067
    %vm1074 = vweird.f32 %v1068
    %vm1075 = vmor %vm1073, %vm1074
    %v1076 = vsel %vm1075, %v1068, %v1072
    %v1077 = vand.u32 2147483647, %v1067
    %vm1078 = vcmp.eq.f32.partialorder %v1077, 8.507059e+37
    %v1079 = vand.u32 %v1067, 2147483648
    %v1080 = vor.u32 1.1754944e-38, %v1079
    %v1081 = vsel %vm1078, %v1080, %v1076
    %v1082 = vmul.f32 1.0, %v1081
    %v1083 = vmul.f32 %v1082, 2.0
    %v1084 = vsub.f32 %v1083, 1.0
    %v1086 = vrot.slane %v965, 6
    %v1088 = vmul.f32 %v1082, %v1086
    %1090 = vrot.lane.b32.xlu0 %v1084, 64
    %v1091 = vpop.permute.xlu0 %1090
    %v1093 = vmul.f32 %v1082, %v1091
    %1095 = vrot.lane.b32.xlu0 %v1093, 32
    %v1096 = vpop.permute.xlu0 %1095
    %v1098 = vadd.f32 %v1088, %v1096
    %v1099 = vtanh.pop %v1098
    %1101 = vrot.lane.b32.xlu0 %v1099, 64
    %v1102 = vpop.permute.xlu0 %1101
    %v1104 = vmul.f32 %v1082, %v1102
    %1106 = vrot.lane.b32.xlu0 %v1104, 32
    %v1107 = vpop.permute.xlu0 %1106
    %v1110 = vrot.slane %v1038, 2
    %1111 = vrot.lane.b32.xlu0 %v1110, 64
    %v1112 = vpop.permute.xlu0 %1111
    %v1114 = vsel %vm108, %v1107, %v1112
    %v1115 = vpack.c.bf16 %v1114, %v1114
    %v1117 = vrot.slane %v1115, 3
    %v1119 = vsel %vm194, %v1117, 0
    %1121 = vmatpush.bf16.msra.mxu0 0
    %1122 = vmatpush.bf16.msra.mxu0 0
    %1123 = vmatpush.bf16.msra.mxu0 0
    %1124 = vmatpush.bf16.msra.mxu0 0
    %1125 = vmatpush.bf16.msra.mxu0 %v189
    %1126 = vmatpush.bf16.msra.mxu0 %v188
    %1127 = vmatpush.bf16.msra.mxu0 %v187
    %1128 = vmatpush.bf16.msra.mxu0 %v186
    %1129 = vmatmul.bf16.gmra.mxu0 %v1119
    %v1130 = vpop.f32.mrf.mxu0
    %v1131 = vadd.f32 %v64, %v1130
    %v1132 = vpop.f32.mrf.mxu0
    %1133 = vdwg.mxu0
    %v1134 = vxor.u32 %v1131, 2147483648
    %v1135 = vmul.f32 %v1134, 1.442695
    %v1136 = vpow.pop %v1135
    %v1137 = vadd.f32 %v1136, 1.0
    %v1138 = vrcp.pop %v1137
    %v1139 = vmul.f32 %v1137, %v1138
    %v1140 = vsub.f32 1.0, %v1139
    %v1141 = vmul.f32 %v1138, %v1140
    %v1142 = vadd.f32 %v1138, %v1141
    %vm1143 = vweird.f32 %v1137
    %vm1144 = vweird.f32 %v1138
    %vm1145 = vmor %vm1143, %vm1144
    %v1146 = vsel %vm1145, %v1138, %v1142
    %v1147 = vand.u32 2147483647, %v1137
    %vm1148 = vcmp.eq.f32.partialorder %v1147, 8.507059e+37
    %v1149 = vand.u32 %v1137, 2147483648
    %v1150 = vor.u32 1.1754944e-38, %v1149
    %v1151 = vsel %vm1148, %v1150, %v1146
    %v1152 = vmul.f32 1.0, %v1151
    %v1153 = vmul.f32 %v1152, 2.0
    %v1154 = vsub.f32 %v1153, 1.0
    %v1155 = vmul.f32 %v1152, %v1032
    %1157 = vrot.lane.b32.xlu0 %v1154, 64
    %v1158 = vpop.permute.xlu0 %1157
    %v1160 = vmul.f32 %v1152, %v1158
    %1162 = vrot.lane.b32.xlu0 %v1160, 32
    %v1163 = vpop.permute.xlu0 %1162
    %v1165 = vadd.f32 %v1155, %v1163
    %v1166 = vtanh.pop %v1165
    %1168 = vrot.lane.b32.xlu0 %v1166, 64
    %v1169 = vpop.permute.xlu0 %1168
    %v1171 = vmul.f32 %v1152, %v1169
    %v1172 = vrot.slane %v380, 6
    %v1174 = vrot.slane %v513, 4
    %v1176 = vrot.slane %v646, 2
    %v1178 = vrot.slane %v905, 6
    %v1180 = vrot.slane %v1038, 4
    %v1183 = vrot.slane %v1171, 2
    %v1185 = vsel %vm78, %v248, %v1172
    %vm1186 = vcmask 1043456
    %v1187 = vsel %vm1186, %v1185, %v1174
    %vm1188 = vcmask 1045504
    %v1189 = vsel %vm1188, %v1187, %v1176
    %v1190 = vsel %vm78, %v773, %v1178
    %v1191 = vsel %vm1186, %v1190, %v1180
    %v1192 = vsel %vm1188, %v1191, %v1183
    %v1194 = vperm.slane %v66, 0
    %1195 = vrot.lane.b32.xlu0 %v1194, 96
    %v1196 = vpop.permute.xlu0 %1195
    %v1198 = vmul.f32 %v1189, %v1196
    %v1199 = vmul.f32 %v1192, %v1196
    %1202 = vrot.lane.b32.xlu0 %v1198, 32
    %v1203 = vpop.permute.xlu0 %1202
    %1204 = vrot.lane.b32.xlu0 %v1199, 32
    %v1205 = vpop.permute.xlu0 %1204
    %v1208 = vsel %vm108, %v1203, 0.0
    %1209 = vadd.xlane.f32.xlu0 %v1208
    %v1210 = vpop.xlane.xlu0 %1209
    %v1211 = vsel %vm108, %v1205, 0.0
    %1212 = vadd.xlane.f32.xlu0 %v1211
    %v1213 = vpop.xlane.xlu0 %1212
    %v1215 = vperm.slane %v67, 0
    %v1217 = vadd.f32 %v1210, %v1215
    %v1218 = vadd.f32 %v1213, %v1215
    %vm1219 = vcmask 7168
    %1220 = vst.msk [vmem:[%s8] sm:$0xff] %vm1219, %v1217
    %1221 = vst.msk [vmem:[%s8 + $0x8] sm:$0xff] %vm1219, %v1218
    // Predicated region
    $region38: #{tpu_custom_call.1} parent=1 // pred_check
      _
    $region39: #{tpu_custom_call.1} parent=1 // pred_check_branch
      %1223 = sbr.rel (0) target = $region41
    $region40: #{tpu_custom_call.1} parent=1 // pred_region
      _
    $region41: #{tpu_custom_call.1} parent=1 // pred_fallthru
      _
    // Predicated region
    $region42: #{tpu_custom_call.1} parent=1 // pred_check
      _
    $region43: #{tpu_custom_call.1} parent=1 // pred_check_branch
      %1225 = sbr.rel (0) target = $region45
    $region44: #{tpu_custom_call.1} parent=1 // pred_region
      _
    $region45: #{tpu_custom_call.1} parent=1 // pred_fallthru
      _
    %1226 = vsyncpa [#allocation4], 1

</llo_original>
